<compile_context>
chip_gen: v7x
topology: tpu7x:2x2x1
jax: 0.10.0
libtpu: 0.0.40
codegen_flags: <defaults>
</compile_context>

<pallas_src>
import functools

import jax
import jax.numpy as jnp
import numpy as np
from jax.experimental import pallas as pl
from jax.experimental.pallas import tpu as pltpu


# ----------------------------------------------------------------------------
# Small helpers
# ----------------------------------------------------------------------------

def _round_up(x, m):
    return (x + m - 1) // m * m


def _pick_lane_tile(hw, cap=2048):
    """Largest divisor of hw that is a multiple of 128 and <= cap (else hw)."""
    best = None
    d = 128
    while d <= min(cap, hw):
        if hw % d == 0:
            best = d
        d += 128
    return best if best is not None else hw


@functools.lru_cache(maxsize=None)
def _vmem_limit_bytes():
    """Scoped-VMEM limit derived from the chip (v7x 64 MiB vs v5e/v6e 128 MiB)."""
    cap = 64 * 1024 * 1024
    try:
        info = pltpu.get_tpu_info()
        cap = int(getattr(info, "vmem_capacity_bytes", cap))
    except Exception:
        pass
    return int(cap * 3 // 4)   # headroom for Mosaic-internal scratch


def _pool_matrix(h, w, s):
    """(HW, HWo) matrix expressing AvgPool2d(stride=s); 1/s^2 folded in."""
    ho, wo = h // s, w // s
    p = np.arange(h * w)
    q = np.arange(ho * wo)
    py, px = p // w, p % w
    qy, qx = q // wo, q % wo
    m = ((py[:, None] // s == qy[None, :]) &
         (px[:, None] // s == qx[None, :])).astype(np.float32) / float(s * s)
    return jnp.asarray(m)


def _border_masks(h, w):
    """(9, HW) {0,1} masks zeroing the out-of-image taps of a padded 3x3 conv."""
    hw = h * w
    p = np.arange(hw)
    py, px = p // w, p % w
    rows = []
    for ky in range(3):
        for kx in range(3):
            dy, dx = ky - 1, kx - 1
            valid = ((py + dy >= 0) & (py + dy < h) &
                     (px + dx >= 0) & (px + dx < w))
            rows.append(valid.astype(np.float32))
    return jnp.asarray(np.stack(rows))


# ----------------------------------------------------------------------------
# Pallas kernels (all operate on per-image (C, H*W) slabs; lane dim = spatial)
# ----------------------------------------------------------------------------

def _conv1x1_bn_relu_kernel(x_ref, w_ref, scale_ref, bias_ref, o_ref, *,
                            mxu_dtype):
    # x_ref: (Cin, TL)  w_ref: (Cout, Cin)  scale/bias: (Cout, 1) f32
    # o_ref: (Cout, TL) -- lane-dense store over the flattened spatial tile.
    y = jnp.dot(w_ref[...].astype(mxu_dtype), x_ref[...].astype(mxu_dtype),
                preferred_element_type=jnp.float32)
    y = jnp.maximum(y * scale_ref[...] + bias_ref[...], 0.0)
    o_ref[...] = y.astype(o_ref.dtype)


def _conv3x3_bn_relu_kernel(x_ref, w_ref, scale_ref, bias_ref, mask_ref,
                            o_ref, im_ref, *, img_w, mxu_dtype):
    # x_ref   : (Cp, HW)    one image, channel-major, flattened spatial
    # w_ref   : (Cp, 9*Cp)  3x3 taps folded into the matmul K dimension
    # mask_ref: (9, HW)     border masks (host-precomputed, replaces jnp.pad)
    # im_ref  : VMEM scratch (9*Cp, HW) im2col slab; Cp is a multiple of 8 so
    #           every store below is sublane-aligned.
    # o_ref   : (Cp, HW)
    cp, _ = x_ref.shape
    x = x_ref[...]
    for ky in range(3):
        for kx in range(3):
            dy, dx = ky - 1, kx - 1
            off = dy * img_w + dx
            k = ky * 3 + kx
            # Shift along the flattened lane dim (lane slice+concat; pltpu.roll
            # is a single-op alternative) and zero the out-of-image taps -- no
            # spatially padded copy of the activation is ever materialized.
            shifted = x if off == 0 else jnp.roll(x, -off, axis=1)
            tap = shifted * mask_ref[k:k + 1, :]
            im_ref[k * cp:(k + 1) * cp, :] = tap.astype(im_ref.dtype)
    y = jnp.dot(w_ref[...].astype(mxu_dtype), im_ref[...].astype(mxu_dtype),
                preferred_element_type=jnp.float32)
    y = jnp.maximum(y * scale_ref[...] + bias_ref[...], 0.0)
    o_ref[...] = y.astype(o_ref.dtype)


def _tail_kernel(y2_ref, x_ref, w3_ref, s3_ref, b3_ref, *rest, stride,
                 has_downsample, mxu_dtype):
    # Fused:  avgpool(stride) -> conv3 (1x1) -> bn3
    #         [downsample: avgpool(stride) -> 1x1 conv -> bnd | identity]
    #         -> residual add -> relu3
    idx = 0
    if stride > 1:
        pool_ref = rest[idx]
        idx += 1
    if has_downsample:
        wd_ref, sd_ref, bd_ref = rest[idx:idx + 3]
        idx += 3
    o_ref = rest[idx]

    if stride > 1:
        pool = pool_ref[...].astype(mxu_dtype)       # (HW, HWo), 1/s^2 folded in
        y2p = jnp.dot(y2_ref[...].astype(mxu_dtype), pool,
                      preferred_element_type=jnp.float32)
    else:
        y2p = y2_ref[...].astype(jnp.float32)
    main = jnp.dot(w3_ref[...].astype(mxu_dtype), y2p.astype(mxu_dtype),
                   preferred_element_type=jnp.float32)
    main = main * s3_ref[...] + b3_ref[...]

    if has_downsample:
        if stride > 1:
            xp = jnp.dot(x_ref[...].astype(mxu_dtype), pool,
                         preferred_element_type=jnp.float32)
        else:
            xp = x_ref[...].astype(jnp.float32)
        ident = jnp.dot(wd_ref[...].astype(mxu_dtype), xp.astype(mxu_dtype),
                        preferred_element_type=jnp.float32)
        ident = ident * sd_ref[...] + bd_ref[...]
    else:
        ident = x_ref[...].astype(jnp.float32)

    o_ref[...] = jnp.maximum(main + ident, 0.0).astype(o_ref.dtype)


# ----------------------------------------------------------------------------
# Pallas wrappers
# ----------------------------------------------------------------------------

def conv1x1_bn_relu(x, w, scale, bias, *, compute_dtype, lane_cap=2048):
    """x: (N, Cin, HW) -> (N, Cout, HW).  1x1 conv + BN + ReLU."""
    n, cin, hw = x.shape
    cout = w.shape[0]
    tl = _pick_lane_tile(hw, lane_cap)
    itemsize = jnp.dtype(compute_dtype).itemsize
    cost = pl.CostEstimate(
        flops=2 * n * hw * cin * cout, transcendentals=0,
        bytes_accessed=int(n * cin * hw * x.dtype.itemsize + cin * cout * 4
                           + n * cout * hw * itemsize))
    kern = functools.partial(_conv1x1_bn_relu_kernel, mxu_dtype=compute_dtype)
    return pl.pallas_call(
        kern,
        grid=(n, hw // tl),
        in_specs=[
            pl.BlockSpec((None, cin, tl), lambda i, t: (i, 0, t)),
            pl.BlockSpec((cout, cin), lambda i, t: (0, 0)),
            pl.BlockSpec((cout, 1), lambda i, t: (0, 0)),
            pl.BlockSpec((cout, 1), lambda i, t: (0, 0)),
        ],
        out_specs=pl.BlockSpec((None, cout, tl), lambda i, t: (i, 0, t)),
        out_shape=jax.ShapeDtypeStruct((n, cout, hw), compute_dtype),
        compiler_params=pltpu.CompilerParams(
            dimension_semantics=("parallel", "parallel"),
            vmem_limit_bytes=_vmem_limit_bytes()),
        cost_estimate=cost,
    )(x, w, scale.reshape(cout, 1), bias.reshape(cout, 1))


def conv3x3_bn_relu(x, w_flat, scale, bias, *, h, w, compute_dtype):
    """x: (N, Cp, HW) -> (N, Cp, HW).  3x3 conv (pad=1) + BN + ReLU, taps in K."""
    n, cp, hw = x.shape
    assert cp % 8 == 0 and w_flat.shape == (cp, 9 * cp)
    mask = _border_masks(h, w).astype(compute_dtype)
    itemsize = jnp.dtype(compute_dtype).itemsize
    cost = pl.CostEstimate(
        flops=2 * n * hw * (9 * cp) * cp, transcendentals=0,
        bytes_accessed=int((2 * n * cp * hw + 9 * cp * cp + 9 * hw) * itemsize))
    kern = functools.partial(_conv3x3_bn_relu_kernel, img_w=w,
                             mxu_dtype=compute_dtype)
    return pl.pallas_call(
        kern,
        grid=(n,),
        in_specs=[
            pl.BlockSpec((None, cp, hw), lambda i: (i, 0, 0)),
            pl.BlockSpec((cp, 9 * cp), lambda i: (0, 0)),
            pl.BlockSpec((cp, 1), lambda i: (0, 0)),
            pl.BlockSpec((cp, 1), lambda i: (0, 0)),
            pl.BlockSpec((9, hw), lambda i: (0, 0)),
        ],
        out_specs=pl.BlockSpec((None, cp, hw), lambda i: (i, 0, 0)),
        out_shape=jax.ShapeDtypeStruct((n, cp, hw), compute_dtype),
        scratch_shapes=[pltpu.VMEM((9 * cp, hw), compute_dtype)],
        compiler_params=pltpu.CompilerParams(
            dimension_semantics=("parallel",),
            vmem_limit_bytes=_vmem_limit_bytes()),
        cost_estimate=cost,
    )(x, w_flat, scale.reshape(cp, 1), bias.reshape(cp, 1), mask)


def pool_conv3_residual(y2, x, w3, s3, b3, *, stride, wd=None, sd=None, bd=None,
                        pool=None, compute_dtype, out_dtype):
    """Fused avgpool(stride) + conv3 + bn3 [+ downsample branch] + add + relu3.

    y2: (N, Cp, HW) main-path activation;  x: (N, Cin, HW) block input.
    Output: (N, Cexp, HWo).  NOTE: at the toy size HWo=64 (<128) so the final
    store is lane-masked; at production CLIP sizes HWo >= 784 and is dense.
    """
    n, cp, hw = y2.shape
    cin = x.shape[1]
    cexp = w3.shape[0]
    hwo = hw // (stride * stride)
    has_downsample = wd is not None

    in_specs = [
        pl.BlockSpec((None, cp, hw), lambda i: (i, 0, 0)),    # y2
        pl.BlockSpec((None, cin, hw), lambda i: (i, 0, 0)),   # x
        pl.BlockSpec((cexp, cp), lambda i: (0, 0)),           # w3
        pl.BlockSpec((cexp, 1), lambda i: (0, 0)),            # s3
        pl.BlockSpec((cexp, 1), lambda i: (0, 0)),            # b3
    ]
    args = [y2, x, w3, s3.reshape(cexp, 1), b3.reshape(cexp, 1)]
    if stride > 1:
        in_specs.append(pl.BlockSpec((hw, hwo), lambda i: (0, 0)))
        args.append(pool.astype(compute_dtype))
    if has_downsample:
        in_specs += [pl.BlockSpec((cexp, cin), lambda i: (0, 0)),
                     pl.BlockSpec((cexp, 1), lambda i: (0, 0)),
                     pl.BlockSpec((cexp, 1), lambda i: (0, 0))]
        args += [wd, sd.reshape(cexp, 1), bd.reshape(cexp, 1)]

    flops = 2 * n * (cp * hw * hwo + cexp * cp * hwo)
    if has_downsample:
        flops += 2 * n * (cin * hw * hwo + cexp * cin * hwo)
    itemsize = jnp.dtype(compute_dtype).itemsize
    cost = pl.CostEstimate(
        flops=int(flops), transcendentals=0,
        bytes_accessed=int(n * cp * hw * itemsize
                           + n * cin * hw * x.dtype.itemsize
                           + n * cexp * hwo * jnp.dtype(out_dtype).itemsize))
    kern = functools.partial(_tail_kernel, stride=stride,
                             has_downsample=has_downsample,
                             mxu_dtype=compute_dtype)
    return pl.pallas_call(
        kern,
        grid=(n,),
        in_specs=in_specs,
        out_specs=pl.BlockSpec((None, cexp, hwo), lambda i: (i, 0, 0)),
        out_shape=jax.ShapeDtypeStruct((n, cexp, hwo), out_dtype),
        compiler_params=pltpu.CompilerParams(
            dimension_semantics=("parallel",),
            vmem_limit_bytes=_vmem_limit_bytes()),
        cost_estimate=cost,
    )(*args)


# ----------------------------------------------------------------------------
# Bottleneck forward (NCHW end-to-end; only free reshapes at the boundary)
# ----------------------------------------------------------------------------

def bottleneck_forward(x_nchw, p, *, stride, compute_dtype=jnp.float32):
    n, cin, h, w = x_nchw.shape
    hw = h * w
    planes = p["w1"].shape[0]
    cexp = p["w3"].shape[0]
    cp = _round_up(planes, 8)   # pad intermediate channels to full sublanes
    f32 = jnp.float32

    # (N, C, H, W) -> (N, C, H*W): a free contiguous reshape; the flattened
    # spatial axis becomes the lane dimension of every kernel.
    x = x_nchw.reshape(n, cin, hw)

    # --- fold/pad params into kernel layouts (tiny, traced once under jit) ---
    w1 = jnp.zeros((cp, cin), f32).at[:planes].set(p["w1"])
    s1 = jnp.zeros((cp,), f32).at[:planes].set(p["s1"])
    b1 = jnp.zeros((cp,), f32).at[:planes].set(p["b1"])
    w2 = jnp.zeros((cp, cp, 3, 3), f32).at[:planes, :planes].set(p["w2"])
    w2 = jnp.transpose(w2, (0, 2, 3, 1)).reshape(cp, 9 * cp)   # taps into K
    s2 = jnp.zeros((cp,), f32).at[:planes].set(p["s2"])
    b2 = jnp.zeros((cp,), f32).at[:planes].set(p["b2"])
    w3 = jnp.zeros((cexp, cp), f32).at[:, :planes].set(p["w3"])

    # conv1 (1x1) + bn1 + relu1
    y1 = conv1x1_bn_relu(x, w1, s1, b1, compute_dtype=compute_dtype)
    # conv2 (3x3, pad=1) + bn2 + relu2   (im2col in VMEM, single K-folded dot)
    y2 = conv3x3_bn_relu(y1, w2, s2, b2, h=h, w=w, compute_dtype=compute_dtype)

    # Tail: avgpool + conv3 + bn3 + downsample branch + residual + relu3.
    has_downsample = stride > 1 or cin != cexp
    pool = _pool_matrix(h, w, stride) if stride > 1 else None
    out = pool_conv3_residual(
        y2, x, w3, p["s3"], p["b3"], stride=stride,
        wd=p["wd"] if has_downsample else None,
        sd=p["sd"] if has_downsample else None,
        bd=p["bd"] if has_downsample else None,
        pool=pool, compute_dtype=compute_dtype, out_dtype=x_nchw.dtype)

    ho, wo = h // stride, w // stride
    return out.reshape(n, cexp, ho, wo)   # free reshape back to NCHW


# ----------------------------------------------------------------------------
# Pure-JAX reference (f32, for correctness check)
# ----------------------------------------------------------------------------

def _avgpool_nchw(x, s):
    n, c, h, w = x.shape
    return x.reshape(n, c, h // s, s, w // s, s).mean(axis=(3, 5))


def reference_forward(x, p, *, stride):
    dn = ("NCHW", "OIHW", "NCHW")
    conv1x1 = lambda t, w: jax.lax.conv_general_dilated(
        t, w[:, :, None, None], (1, 1), "VALID", dimension_numbers=dn)
    bn = lambda t, s, b: t * s[None, :, None, None] + b[None, :, None, None]
    cin = x.shape[1]
    cexp = p["w3"].shape[0]

    out = jnp.maximum(bn(conv1x1(x, p["w1"]), p["s1"], p["b1"]), 0.0)
    out = jax.lax.conv_general_dilated(out, p["w2"], (1, 1), ((1, 1), (1, 1)),
                                       dimension_numbers=dn)
    out = jnp.maximum(bn(out, p["s2"], p["b2"]), 0.0)
    if stride > 1:
        out = _avgpool_nchw(out, stride)
    out = bn(conv1x1(out, p["w3"]), p["s3"], p["b3"])

    identity = x
    if stride > 1 or cin != cexp:
        if stride > 1:
            identity = _avgpool_nchw(x, stride)
        identity = bn(conv1x1(identity, p["wd"]), p["sd"], p["bd"])
    return jnp.maximum(out + identity, 0.0)


# ----------------------------------------------------------------------------
# Parameter init + main
# ----------------------------------------------------------------------------

def _bn_fold(key, c, eps=1e-5):
    k1, k2, k3, k4 = jax.random.split(key, 4)
    gamma = 1.0 + 0.1 * jax.random.normal(k1, (c,), jnp.float32)
    beta = 0.1 * jax.random.normal(k2, (c,), jnp.float32)
    mean = 0.1 * jax.random.normal(k3, (c,), jnp.float32)
    var = jax.random.uniform(k4, (c,), jnp.float32, 0.5, 1.5)
    scale = gamma / jnp.sqrt(var + eps)
    shift = beta - mean * scale
    return scale, shift


def make_params(key, inplanes, planes):
    expansion = 4
    cexp = planes * expansion
    ks = jax.random.split(key, 8)
    rnd = lambda k, s: 0.1 * jax.random.normal(k, s, jnp.float32)
    p = {}
    p["w1"] = rnd(ks[0], (planes, inplanes))          # conv1 1x1  (O, I)
    p["s1"], p["b1"] = _bn_fold(ks[1], planes)
    p["w2"] = rnd(ks[2], (planes, planes, 3, 3))      # conv2 3x3  (OIHW)
    p["s2"], p["b2"] = _bn_fold(ks[3], planes)
    p["w3"] = rnd(ks[4], (cexp, planes))              # conv3 1x1  (O, I)
    p["s3"], p["b3"] = _bn_fold(ks[5], cexp)
    p["wd"] = rnd(ks[6], (cexp, inplanes))            # downsample 1x1 (O, I)
    p["sd"], p["bd"] = _bn_fold(ks[7], cexp)
    return p


if __name__ == "__main__":
    key = jax.random.PRNGKey(0)
    kx, kp, kx2 = jax.random.split(key, 3)

    # --- Config 1: stride=2 with downsample branch (f32) ----------------------
    inplanes, planes, stride = 4, 4, 2
    N, H, W = 2, 16, 16
    x = jax.random.normal(kx, (N, inplanes, H, W), jnp.float32)   # NCHW input
    params = make_params(kp, inplanes, planes)

    fwd = jax.jit(functools.partial(bottleneck_forward, stride=stride))
    out = jax.block_until_ready(fwd(x, params))
    ref = reference_forward(x, params, stride=stride)
    assert out.shape == ref.shape == (N, planes * 4, H // stride, W // stride)
    assert jnp.allclose(out, ref, atol=5e-4, rtol=5e-4), (
        float(jnp.max(jnp.abs(out - ref))))

    # --- Same config, bf16 MXU operands, f32 accumulation + f32 epilogue ------
    fwd_bf16 = jax.jit(functools.partial(bottleneck_forward, stride=stride,
                                         compute_dtype=jnp.bfloat16))
    out_bf16 = jax.block_until_ready(fwd_bf16(x, params))
    # bf16 intermediates round-trip through HBM -> looser inference tolerance.
    assert jnp.allclose(out_bf16, ref, atol=2e-1, rtol=2e-1), (
        float(jnp.max(jnp.abs(out_bf16 - ref))))

    # --- Config 2: stride=1, inplanes == expansion*planes (identity skip, f32) -
    inplanes2, planes2, stride2 = 16, 4, 1
    x2 = jax.random.normal(kx2, (N, inplanes2, H, W), jnp.float32)
    params2 = make_params(jax.random.fold_in(kp, 1), inplanes2, planes2)
    fwd2 = jax.jit(functools.partial(bottleneck_forward, stride=stride2))
    out2 = jax.block_until_ready(fwd2(x2, params2))
    ref2 = reference_forward(x2, params2, stride=stride2)
    assert out2.shape == ref2.shape == (N, planes2 * 4, H, W)
    assert jnp.allclose(out2, ref2, atol=5e-4, rtol=5e-4), (
        float(jnp.max(jnp.abs(out2 - ref2))))

    print("KERNEL_OK")
</pallas_src>

<mosaic_0001>
module attributes {stable_mosaic.version = 11 : i64} {
  func.func @_conv1x1_bn_relu_kernel(%arg0: i32, %arg1: i32, %arg2: memref<1x4x256xf32, #tpu.memory_space<vmem>>, %arg3: memref<8x4xf32, #tpu.memory_space<vmem>>, %arg4: memref<8x1xf32, #tpu.memory_space<vmem>>, %arg5: memref<8x1xf32, #tpu.memory_space<vmem>>, %arg6: memref<1x8x256xf32, #tpu.memory_space<vmem>>) attributes {dimension_semantics = [#tpu.dimension_semantics<parallel>, #tpu.dimension_semantics<parallel>], iteration_bounds = array<i64: 2, 1>, scalar_prefetch = 0 : i64, scratch_operands = 0 : i64, tpu.core_type = #tpu.core_type<tc>, window_params = [{transform_indices = @transform_0, window_bounds = array<i64: 1, 4, 256>}, {pipeline_mode = #tpu.pipeline_mode<synchronous>, transform_indices = @transform_1, window_bounds = array<i64: 8, 4>}, {pipeline_mode = #tpu.pipeline_mode<synchronous>, transform_indices = @transform_2, window_bounds = array<i64: 8, 1>}, {pipeline_mode = #tpu.pipeline_mode<synchronous>, transform_indices = @transform_3, window_bounds = array<i64: 8, 1>}, {transform_indices = @transform_4, window_bounds = array<i64: 1, 8, 256>}]} {
    %c0 = arith.constant 0 : index
    %c0_0 = arith.constant 0 : index
    %0 = vector.load %arg3[%c0, %c0_0] : memref<8x4xf32, #tpu.memory_space<vmem>>, vector<8x4xf32>
    %c0_1 = arith.constant 0 : index
    %c0_2 = arith.constant 0 : index
    %c0_3 = arith.constant 0 : index
    %1 = vector.load %arg2[%c0_1, %c0_2, %c0_3] : memref<1x4x256xf32, #tpu.memory_space<vmem>>, vector<1x4x256xf32>
    %2 = vector.shape_cast %1 : vector<1x4x256xf32> to vector<4x256xf32>
    %cst = arith.constant dense<0.000000e+00> : vector<8x256xf32>
    %3 = tpu.matmul %0, %2, %cst {dimension_numbers = #tpu.dot_dimension_numbers<[1], [0], [0], [1], [0, 0, 1, 1], [], []>} : vector<8x4xf32>, vector<4x256xf32>, vector<8x256xf32> -> vector<8x256xf32>
    %c0_4 = arith.constant 0 : index
    %c0_5 = arith.constant 0 : index
    %4 = vector.load %arg4[%c0_4, %c0_5] : memref<8x1xf32, #tpu.memory_space<vmem>>, vector<8x1xf32>
    %5 = vector.broadcast %4 : vector<8x1xf32> to vector<8x256xf32>
    %6 = arith.mulf %3, %5 : vector<8x256xf32>
    %c0_6 = arith.constant 0 : index
    %c0_7 = arith.constant 0 : index
    %7 = vector.load %arg5[%c0_6, %c0_7] : memref<8x1xf32, #tpu.memory_space<vmem>>, vector<8x1xf32>
    %8 = vector.broadcast %7 : vector<8x1xf32> to vector<8x256xf32>
    %9 = arith.addf %6, %8 : vector<8x256xf32>
    %cst_8 = arith.constant 0.000000e+00 : f32
    %10 = vector.broadcast %cst_8 : f32 to vector<8x256xf32>
    %11 = arith.maximumf %9, %10 : vector<8x256xf32>
    %c0_9 = arith.constant 0 : index
    %c0_10 = arith.constant 0 : index
    %c0_11 = arith.constant 0 : index
    %12 = vector.load %arg6[%c0_9, %c0_10, %c0_11] : memref<1x8x256xf32, #tpu.memory_space<vmem>>, vector<1x8x256xf32>
    %13 = vector.shape_cast %12 : vector<1x8x256xf32> to vector<8x256xf32>
    %14 = vector.shape_cast %11 : vector<8x256xf32> to vector<1x8x256xf32>
    tpu.vector_store %arg6[%c0_9, %c0_10, %c0_11], %14 {strides = array<i32>} : memref<1x8x256xf32, #tpu.memory_space<vmem>>, vector<1x8x256xf32>,
    return
  }
  func.func @transform_0(%arg0: i32, %arg1: i32) -> (i32, i32, i32) {
    %c0_i32 = arith.constant 0 : i32
    %c0_i32_0 = arith.constant 0 : i32
    return %arg0, %c0_i32, %arg1 : i32, i32, i32
  }
  func.func @transform_1(%arg0: i32, %arg1: i32) -> (i32, i32) {
    %c0_i32 = arith.constant 0 : i32
    %c0_i32_0 = arith.constant 0 : i32
    %c0_i32_1 = arith.constant 0 : i32
    return %c0_i32, %c0_i32_0 : i32, i32
  }
  func.func @transform_2(%arg0: i32, %arg1: i32) -> (i32, i32) {
    %c0_i32 = arith.constant 0 : i32
    %c0_i32_0 = arith.constant 0 : i32
    %c0_i32_1 = arith.constant 0 : i32
    return %c0_i32, %c0_i32_0 : i32, i32
  }
  func.func @transform_3(%arg0: i32, %arg1: i32) -> (i32, i32) {
    %c0_i32 = arith.constant 0 : i32
    %c0_i32_0 = arith.constant 0 : i32
    %c0_i32_1 = arith.constant 0 : i32
    return %c0_i32, %c0_i32_0 : i32, i32
  }
  func.func @transform_4(%arg0: i32, %arg1: i32) -> (i32, i32, i32) {
    %c0_i32 = arith.constant 0 : i32
    %c0_i32_0 = arith.constant 0 : i32
    return %arg0, %c0_i32, %arg1 : i32, i32, i32
  }
}

module attributes {stable_mosaic.version = 11 : i64} {
  func.func @_conv3x3_bn_relu_kernel(%arg0: i32, %arg1: memref<1x8x256xf32, #tpu.memory_space<vmem>>, %arg2: memref<8x72xf32, #tpu.memory_space<vmem>>, %arg3: memref<8x1xf32, #tpu.memory_space<vmem>>, %arg4: memref<8x1xf32, #tpu.memory_space<vmem>>, %arg5: memref<9x256xf32, #tpu.memory_space<vmem>>, %arg6: memref<1x8x256xf32, #tpu.memory_space<vmem>>, %arg7: memref<72x256xf32, #tpu.memory_space<vmem>>) attributes {dimension_semantics = [#tpu.dimension_semantics<parallel>], iteration_bounds = array<i64: 2>, scalar_prefetch = 0 : i64, scratch_operands = 1 : i64, tpu.core_type = #tpu.core_type<tc>, window_params = [{transform_indices = @transform_0, window_bounds = array<i64: 1, 8, 256>}, {pipeline_mode = #tpu.pipeline_mode<synchronous>, transform_indices = @transform_1, window_bounds = array<i64: 8, 72>}, {pipeline_mode = #tpu.pipeline_mode<synchronous>, transform_indices = @transform_2, window_bounds = array<i64: 8, 1>}, {pipeline_mode = #tpu.pipeline_mode<synchronous>, transform_indices = @transform_3, window_bounds = array<i64: 8, 1>}, {pipeline_mode = #tpu.pipeline_mode<synchronous>, transform_indices = @transform_4, window_bounds = array<i64: 9, 256>}, {transform_indices = @transform_5, window_bounds = array<i64: 1, 8, 256>}]} {
    %c0 = arith.constant 0 : index
    %c0_0 = arith.constant 0 : index
    %c0_1 = arith.constant 0 : index
    %0 = vector.load %arg1[%c0, %c0_0, %c0_1] : memref<1x8x256xf32, #tpu.memory_space<vmem>>, vector<1x8x256xf32>
    %1 = vector.shape_cast %0 : vector<1x8x256xf32> to vector<8x256xf32>
    %2 = vector.extract_strided_slice %1 {offsets = [0, 239], sizes = [8, 17], strides = [1, 1]} : vector<8x256xf32> to vector<8x17xf32>
    %3 = vector.extract_strided_slice %1 {offsets = [0, 0], sizes = [8, 239], strides = [1, 1]} : vector<8x256xf32> to vector<8x239xf32>
    %4 = tpu.concatenate %2, %3 in 1 : vector<8x17xf32>, vector<8x239xf32> -> vector<8x256xf32>
    %c0_2 = arith.constant 0 : index
    %c0_3 = arith.constant 0 : index
    %5 = vector.load %arg5[%c0_2, %c0_3] : memref<9x256xf32, #tpu.memory_space<vmem>>, vector<1x256xf32>
    %6 = vector.broadcast %5 : vector<1x256xf32> to vector<8x256xf32>
    %7 = arith.mulf %4, %6 : vector<8x256xf32>
    %c0_4 = arith.constant 0 : index
    %c0_5 = arith.constant 0 : index
    %8 = vector.load %arg7[%c0_4, %c0_5] : memref<72x256xf32, #tpu.memory_space<vmem>>, vector<8x256xf32>
    tpu.vector_store %arg7[%c0_4, %c0_5], %7 {strides = array<i32>} : memref<72x256xf32, #tpu.memory_space<vmem>>, vector<8x256xf32>,
    %9 = vector.extract_strided_slice %1 {offsets = [0, 240], sizes = [8, 16], strides = [1, 1]} : vector<8x256xf32> to vector<8x16xf32>
    %10 = vector.extract_strided_slice %1 {offsets = [0, 0], sizes = [8, 240], strides = [1, 1]} : vector<8x256xf32> to vector<8x240xf32>
    %11 = tpu.concatenate %9, %10 in 1 : vector<8x16xf32>, vector<8x240xf32> -> vector<8x256xf32>
    %c1 = arith.constant 1 : index
    %c0_6 = arith.constant 0 : index
    %12 = vector.load %arg5[%c1, %c0_6] : memref<9x256xf32, #tpu.memory_space<vmem>>, vector<1x256xf32>
    %13 = vector.broadcast %12 : vector<1x256xf32> to vector<8x256xf32>
    %14 = arith.mulf %11, %13 : vector<8x256xf32>
    %c8 = arith.constant 8 : index
    %c0_7 = arith.constant 0 : index
    %15 = vector.load %arg7[%c8, %c0_7] : memref<72x256xf32, #tpu.memory_space<vmem>>, vector<8x256xf32>
    tpu.vector_store %arg7[%c8, %c0_7], %14 {strides = array<i32>} : memref<72x256xf32, #tpu.memory_space<vmem>>, vector<8x256xf32>,
    %16 = vector.extract_strided_slice %1 {offsets = [0, 241], sizes = [8, 15], strides = [1, 1]} : vector<8x256xf32> to vector<8x15xf32>
    %17 = vector.extract_strided_slice %1 {offsets = [0, 0], sizes = [8, 241], strides = [1, 1]} : vector<8x256xf32> to vector<8x241xf32>
    %18 = tpu.concatenate %16, %17 in 1 : vector<8x15xf32>, vector<8x241xf32> -> vector<8x256xf32>
    %c2 = arith.constant 2 : index
    %c0_8 = arith.constant 0 : index
    %19 = vector.load %arg5[%c2, %c0_8] : memref<9x256xf32, #tpu.memory_space<vmem>>, vector<1x256xf32>
    %20 = vector.broadcast %19 : vector<1x256xf32> to vector<8x256xf32>
    %21 = arith.mulf %18, %20 : vector<8x256xf32>
    %c16 = arith.constant 16 : index
    %c0_9 = arith.constant 0 : index
    %22 = vector.load %arg7[%c16, %c0_9] : memref<72x256xf32, #tpu.memory_space<vmem>>, vector<8x256xf32>
    tpu.vector_store %arg7[%c16, %c0_9], %21 {strides = array<i32>} : memref<72x256xf32, #tpu.memory_space<vmem>>, vector<8x256xf32>,
    %23 = vector.extract_strided_slice %1 {offsets = [0, 255], sizes = [8, 1], strides = [1, 1]} : vector<8x256xf32> to vector<8x1xf32>
    %24 = vector.extract_strided_slice %1 {offsets = [0, 0], sizes = [8, 255], strides = [1, 1]} : vector<8x256xf32> to vector<8x255xf32>
    %25 = tpu.concatenate %23, %24 in 1 : vector<8x1xf32>, vector<8x255xf32> -> vector<8x256xf32>
    %c3 = arith.constant 3 : index
    %c0_10 = arith.constant 0 : index
    %26 = vector.load %arg5[%c3, %c0_10] : memref<9x256xf32, #tpu.memory_space<vmem>>, vector<1x256xf32>
    %27 = vector.broadcast %26 : vector<1x256xf32> to vector<8x256xf32>
    %28 = arith.mulf %25, %27 : vector<8x256xf32>
    %c24 = arith.constant 24 : index
    %c0_11 = arith.constant 0 : index
    %29 = vector.load %arg7[%c24, %c0_11] : memref<72x256xf32, #tpu.memory_space<vmem>>, vector<8x256xf32>
    tpu.vector_store %arg7[%c24, %c0_11], %28 {strides = array<i32>} : memref<72x256xf32, #tpu.memory_space<vmem>>, vector<8x256xf32>,
    %c4 = arith.constant 4 : index
    %c0_12 = arith.constant 0 : index
    %30 = vector.load %arg5[%c4, %c0_12] : memref<9x256xf32, #tpu.memory_space<vmem>>, vector<1x256xf32>
    %31 = vector.broadcast %30 : vector<1x256xf32> to vector<8x256xf32>
    %32 = arith.mulf %1, %31 : vector<8x256xf32>
    %c32 = arith.constant 32 : index
    %c0_13 = arith.constant 0 : index
    %33 = vector.load %arg7[%c32, %c0_13] : memref<72x256xf32, #tpu.memory_space<vmem>>, vector<8x256xf32>
    tpu.vector_store %arg7[%c32, %c0_13], %32 {strides = array<i32>} : memref<72x256xf32, #tpu.memory_space<vmem>>, vector<8x256xf32>,
    %34 = vector.extract_strided_slice %1 {offsets = [0, 1], sizes = [8, 255], strides = [1, 1]} : vector<8x256xf32> to vector<8x255xf32>
    %35 = vector.extract_strided_slice %1 {offsets = [0, 0], sizes = [8, 1], strides = [1, 1]} : vector<8x256xf32> to vector<8x1xf32>
    %36 = tpu.concatenate %34, %35 in 1 : vector<8x255xf32>, vector<8x1xf32> -> vector<8x256xf32>
    %c5 = arith.constant 5 : index
    %c0_14 = arith.constant 0 : index
    %37 = vector.load %arg5[%c5, %c0_14] : memref<9x256xf32, #tpu.memory_space<vmem>>, vector<1x256xf32>
    %38 = vector.broadcast %37 : vector<1x256xf32> to vector<8x256xf32>
    %39 = arith.mulf %36, %38 : vector<8x256xf32>
    %c40 = arith.constant 40 : index
    %c0_15 = arith.constant 0 : index
    %40 = vector.load %arg7[%c40, %c0_15] : memref<72x256xf32, #tpu.memory_space<vmem>>, vector<8x256xf32>
    tpu.vector_store %arg7[%c40, %c0_15], %39 {strides = array<i32>} : memref<72x256xf32, #tpu.memory_space<vmem>>, vector<8x256xf32>,
    %41 = vector.extract_strided_slice %1 {offsets = [0, 15], sizes = [8, 241], strides = [1, 1]} : vector<8x256xf32> to vector<8x241xf32>
    %42 = vector.extract_strided_slice %1 {offsets = [0, 0], sizes = [8, 15], strides = [1, 1]} : vector<8x256xf32> to vector<8x15xf32>
    %43 = tpu.concatenate %41, %42 in 1 : vector<8x241xf32>, vector<8x15xf32> -> vector<8x256xf32>
    %c6 = arith.constant 6 : index
    %c0_16 = arith.constant 0 : index
    %44 = vector.load %arg5[%c6, %c0_16] : memref<9x256xf32, #tpu.memory_space<vmem>>, vector<1x256xf32>
    %45 = vector.broadcast %44 : vector<1x256xf32> to vector<8x256xf32>
    %46 = arith.mulf %43, %45 : vector<8x256xf32>
    %c48 = arith.constant 48 : index
    %c0_17 = arith.constant 0 : index
    %47 = vector.load %arg7[%c48, %c0_17] : memref<72x256xf32, #tpu.memory_space<vmem>>, vector<8x256xf32>
    tpu.vector_store %arg7[%c48, %c0_17], %46 {strides = array<i32>} : memref<72x256xf32, #tpu.memory_space<vmem>>, vector<8x256xf32>,
    %48 = vector.extract_strided_slice %1 {offsets = [0, 16], sizes = [8, 240], strides = [1, 1]} : vector<8x256xf32> to vector<8x240xf32>
    %49 = vector.extract_strided_slice %1 {offsets = [0, 0], sizes = [8, 16], strides = [1, 1]} : vector<8x256xf32> to vector<8x16xf32>
    %50 = tpu.concatenate %48, %49 in 1 : vector<8x240xf32>, vector<8x16xf32> -> vector<8x256xf32>
    %c7 = arith.constant 7 : index
    %c0_18 = arith.constant 0 : index
    %51 = vector.load %arg5[%c7, %c0_18] : memref<9x256xf32, #tpu.memory_space<vmem>>, vector<1x256xf32>
    %52 = vector.broadcast %51 : vector<1x256xf32> to vector<8x256xf32>
    %53 = arith.mulf %50, %52 : vector<8x256xf32>
    %c56 = arith.constant 56 : index
    %c0_19 = arith.constant 0 : index
    %54 = vector.load %arg7[%c56, %c0_19] : memref<72x256xf32, #tpu.memory_space<vmem>>, vector<8x256xf32>
    tpu.vector_store %arg7[%c56, %c0_19], %53 {strides = array<i32>} : memref<72x256xf32, #tpu.memory_space<vmem>>, vector<8x256xf32>,
    %55 = vector.extract_strided_slice %1 {offsets = [0, 17], sizes = [8, 239], strides = [1, 1]} : vector<8x256xf32> to vector<8x239xf32>
    %56 = vector.extract_strided_slice %1 {offsets = [0, 0], sizes = [8, 17], strides = [1, 1]} : vector<8x256xf32> to vector<8x17xf32>
    %57 = tpu.concatenate %55, %56 in 1 : vector<8x239xf32>, vector<8x17xf32> -> vector<8x256xf32>
    %c8_20 = arith.constant 8 : index
    %c0_21 = arith.constant 0 : index
    %58 = vector.load %arg5[%c8_20, %c0_21] : memref<9x256xf32, #tpu.memory_space<vmem>>, vector<1x256xf32>
    %59 = vector.broadcast %58 : vector<1x256xf32> to vector<8x256xf32>
    %60 = arith.mulf %57, %59 : vector<8x256xf32>
    %c64 = arith.constant 64 : index
    %c0_22 = arith.constant 0 : index
    %61 = vector.load %arg7[%c64, %c0_22] : memref<72x256xf32, #tpu.memory_space<vmem>>, vector<8x256xf32>
    tpu.vector_store %arg7[%c64, %c0_22], %60 {strides = array<i32>} : memref<72x256xf32, #tpu.memory_space<vmem>>, vector<8x256xf32>,
    %c0_23 = arith.constant 0 : index
    %c0_24 = arith.constant 0 : index
    %62 = vector.load %arg2[%c0_23, %c0_24] : memref<8x72xf32, #tpu.memory_space<vmem>>, vector<8x72xf32>
    %c0_25 = arith.constant 0 : index
    %c0_26 = arith.constant 0 : index
    %63 = vector.load %arg7[%c0_25, %c0_26] : memref<72x256xf32, #tpu.memory_space<vmem>>, vector<72x256xf32>
    %cst = arith.constant dense<0.000000e+00> : vector<8x256xf32>
    %64 = tpu.matmul %62, %63, %cst {dimension_numbers = #tpu.dot_dimension_numbers<[1], [0], [0], [1], [0, 0, 1, 1], [], []>} : vector<8x72xf32>, vector<72x256xf32>, vector<8x256xf32> -> vector<8x256xf32>
    %c0_27 = arith.constant 0 : index
    %c0_28 = arith.constant 0 : index
    %65 = vector.load %arg3[%c0_27, %c0_28] : memref<8x1xf32, #tpu.memory_space<vmem>>, vector<8x1xf32>
    %66 = vector.broadcast %65 : vector<8x1xf32> to vector<8x256xf32>
    %67 = arith.mulf %64, %66 : vector<8x256xf32>
    %c0_29 = arith.constant 0 : index
    %c0_30 = arith.constant 0 : index
    %68 = vector.load %arg4[%c0_29, %c0_30] : memref<8x1xf32, #tpu.memory_space<vmem>>, vector<8x1xf32>
    %69 = vector.broadcast %68 : vector<8x1xf32> to vector<8x256xf32>
    %70 = arith.addf %67, %69 : vector<8x256xf32>
    %cst_31 = arith.constant 0.000000e+00 : f32
    %71 = vector.broadcast %cst_31 : f32 to vector<8x256xf32>
    %72 = arith.maximumf %70, %71 : vector<8x256xf32>
    %c0_32 = arith.constant 0 : index
    %c0_33 = arith.constant 0 : index
    %c0_34 = arith.constant 0 : index
    %73 = vector.load %arg6[%c0_32, %c0_33, %c0_34] : memref<1x8x256xf32, #tpu.memory_space<vmem>>, vector<1x8x256xf32>
    %74 = vector.shape_cast %73 : vector<1x8x256xf32> to vector<8x256xf32>
    %75 = vector.shape_cast %72 : vector<8x256xf32> to vector<1x8x256xf32>
    tpu.vector_store %arg6[%c0_32, %c0_33, %c0_34], %75 {strides = array<i32>} : memref<1x8x256xf32, #tpu.memory_space<vmem>>, vector<1x8x256xf32>,
    return
  }
  func.func @transform_0(%arg0: i32) -> (i32, i32, i32) {
    %c0_i32 = arith.constant 0 : i32
    %c0_i32_0 = arith.constant 0 : i32
    %c0_i32_1 = arith.constant 0 : i32
    return %arg0, %c0_i32, %c0_i32_0 : i32, i32, i32
  }
  func.func @transform_1(%arg0: i32) -> (i32, i32) {
    %c0_i32 = arith.constant 0 : i32
    %c0_i32_0 = arith.constant 0 : i32
    %c0_i32_1 = arith.constant 0 : i32
    return %c0_i32, %c0_i32_0 : i32, i32
  }
  func.func @transform_2(%arg0: i32) -> (i32, i32) {
    %c0_i32 = arith.constant 0 : i32
    %c0_i32_0 = arith.constant 0 : i32
    %c0_i32_1 = arith.constant 0 : i32
    return %c0_i32, %c0_i32_0 : i32, i32
  }
  func.func @transform_3(%arg0: i32) -> (i32, i32) {
    %c0_i32 = arith.constant 0 : i32
    %c0_i32_0 = arith.constant 0 : i32
    %c0_i32_1 = arith.constant 0 : i32
    return %c0_i32, %c0_i32_0 : i32, i32
  }
  func.func @transform_4(%arg0: i32) -> (i32, i32) {
    %c0_i32 = arith.constant 0 : i32
    %c0_i32_0 = arith.constant 0 : i32
    %c0_i32_1 = arith.constant 0 : i32
    return %c0_i32, %c0_i32_0 : i32, i32
  }
  func.func @transform_5(%arg0: i32) -> (i32, i32, i32) {
    %c0_i32 = arith.constant 0 : i32
    %c0_i32_0 = arith.constant 0 : i32
    %c0_i32_1 = arith.constant 0 : i32
    return %arg0, %c0_i32, %c0_i32_0 : i32, i32, i32
  }
}

module attributes {stable_mosaic.version = 11 : i64} {
  func.func @_tail_kernel(%arg0: i32, %arg1: memref<1x8x256xf32, #tpu.memory_space<vmem>>, %arg2: memref<1x4x256xf32, #tpu.memory_space<vmem>>, %arg3: memref<16x8xf32, #tpu.memory_space<vmem>>, %arg4: memref<16x1xf32, #tpu.memory_space<vmem>>, %arg5: memref<16x1xf32, #tpu.memory_space<vmem>>, %arg6: memref<256x64xf32, #tpu.memory_space<vmem>>, %arg7: memref<16x4xf32, #tpu.memory_space<vmem>>, %arg8: memref<16x1xf32, #tpu.memory_space<vmem>>, %arg9: memref<16x1xf32, #tpu.memory_space<vmem>>, %arg10: memref<1x16x64xf32, #tpu.memory_space<vmem>>) attributes {dimension_semantics = [#tpu.dimension_semantics<parallel>], iteration_bounds = array<i64: 2>, scalar_prefetch = 0 : i64, scratch_operands = 0 : i64, tpu.core_type = #tpu.core_type<tc>, window_params = [{transform_indices = @transform_0, window_bounds = array<i64: 1, 8, 256>}, {transform_indices = @transform_1, window_bounds = array<i64: 1, 4, 256>}, {pipeline_mode = #tpu.pipeline_mode<synchronous>, transform_indices = @transform_2, window_bounds = array<i64: 16, 8>}, {pipeline_mode = #tpu.pipeline_mode<synchronous>, transform_indices = @transform_3, window_bounds = array<i64: 16, 1>}, {pipeline_mode = #tpu.pipeline_mode<synchronous>, transform_indices = @transform_4, window_bounds = array<i64: 16, 1>}, {pipeline_mode = #tpu.pipeline_mode<synchronous>, transform_indices = @transform_5, window_bounds = array<i64: 256, 64>}, {pipeline_mode = #tpu.pipeline_mode<synchronous>, transform_indices = @transform_6, window_bounds = array<i64: 16, 4>}, {pipeline_mode = #tpu.pipeline_mode<synchronous>, transform_indices = @transform_7, window_bounds = array<i64: 16, 1>}, {pipeline_mode = #tpu.pipeline_mode<synchronous>, transform_indices = @transform_8, window_bounds = array<i64: 16, 1>}, {transform_indices = @transform_9, window_bounds = array<i64: 1, 16, 64>}]} {
    %c0 = arith.constant 0 : index
    %c0_0 = arith.constant 0 : index
    %0 = vector.load %arg6[%c0, %c0_0] : memref<256x64xf32, #tpu.memory_space<vmem>>, vector<256x64xf32>
    %c0_1 = arith.constant 0 : index
    %c0_2 = arith.constant 0 : index
    %c0_3 = arith.constant 0 : index
    %1 = vector.load %arg1[%c0_1, %c0_2, %c0_3] : memref<1x8x256xf32, #tpu.memory_space<vmem>>, vector<1x8x256xf32>
    %2 = vector.shape_cast %1 : vector<1x8x256xf32> to vector<8x256xf32>
    %cst = arith.constant dense<0.000000e+00> : vector<8x64xf32>
    %3 = tpu.matmul %2, %0, %cst {dimension_numbers = #tpu.dot_dimension_numbers<[1], [0], [0], [1], [0, 0, 1, 1], [], []>} : vector<8x256xf32>, vector<256x64xf32>, vector<8x64xf32> -> vector<8x64xf32>
    %c0_4 = arith.constant 0 : index
    %c0_5 = arith.constant 0 : index
    %4 = vector.load %arg3[%c0_4, %c0_5] : memref<16x8xf32, #tpu.memory_space<vmem>>, vector<16x8xf32>
    %cst_6 = arith.constant dense<0.000000e+00> : vector<16x64xf32>
    %5 = tpu.matmul %4, %3, %cst_6 {dimension_numbers = #tpu.dot_dimension_numbers<[1], [0], [0], [1], [0, 0, 1, 1], [], []>} : vector<16x8xf32>, vector<8x64xf32>, vector<16x64xf32> -> vector<16x64xf32>
    %c0_7 = arith.constant 0 : index
    %c0_8 = arith.constant 0 : index
    %6 = vector.load %arg4[%c0_7, %c0_8] : memref<16x1xf32, #tpu.memory_space<vmem>>, vector<16x1xf32>
    %7 = vector.broadcast %6 : vector<16x1xf32> to vector<16x64xf32>
    %8 = arith.mulf %5, %7 : vector<16x64xf32>
    %c0_9 = arith.constant 0 : index
    %c0_10 = arith.constant 0 : index
    %9 = vector.load %arg5[%c0_9, %c0_10] : memref<16x1xf32, #tpu.memory_space<vmem>>, vector<16x1xf32>
    %10 = vector.broadcast %9 : vector<16x1xf32> to vector<16x64xf32>
    %11 = arith.addf %8, %10 : vector<16x64xf32>
    %c0_11 = arith.constant 0 : index
    %c0_12 = arith.constant 0 : index
    %c0_13 = arith.constant 0 : index
    %12 = vector.load %arg2[%c0_11, %c0_12, %c0_13] : memref<1x4x256xf32, #tpu.memory_space<vmem>>, vector<1x4x256xf32>
    %13 = vector.shape_cast %12 : vector<1x4x256xf32> to vector<4x256xf32>
    %cst_14 = arith.constant dense<0.000000e+00> : vector<4x64xf32>
    %14 = tpu.matmul %13, %0, %cst_14 {dimension_numbers = #tpu.dot_dimension_numbers<[1], [0], [0], [1], [0, 0, 1, 1], [], []>} : vector<4x256xf32>, vector<256x64xf32>, vector<4x64xf32> -> vector<4x64xf32>
    %c0_15 = arith.constant 0 : index
    %c0_16 = arith.constant 0 : index
    %15 = vector.load %arg7[%c0_15, %c0_16] : memref<16x4xf32, #tpu.memory_space<vmem>>, vector<16x4xf32>
    %cst_17 = arith.constant dense<0.000000e+00> : vector<16x64xf32>
    %16 = tpu.matmul %15, %14, %cst_17 {dimension_numbers = #tpu.dot_dimension_numbers<[1], [0], [0], [1], [0, 0, 1, 1], [], []>} : vector<16x4xf32>, vector<4x64xf32>, vector<16x64xf32> -> vector<16x64xf32>
    %c0_18 = arith.constant 0 : index
    %c0_19 = arith.constant 0 : index
    %17 = vector.load %arg8[%c0_18, %c0_19] : memref<16x1xf32, #tpu.memory_space<vmem>>, vector<16x1xf32>
    %18 = vector.broadcast %17 : vector<16x1xf32> to vector<16x64xf32>
    %19 = arith.mulf %16, %18 : vector<16x64xf32>
    %c0_20 = arith.constant 0 : index
    %c0_21 = arith.constant 0 : index
    %20 = vector.load %arg9[%c0_20, %c0_21] : memref<16x1xf32, #tpu.memory_space<vmem>>, vector<16x1xf32>
    %21 = vector.broadcast %20 : vector<16x1xf32> to vector<16x64xf32>
    %22 = arith.addf %19, %21 : vector<16x64xf32>
    %23 = arith.addf %11, %22 : vector<16x64xf32>
    %cst_22 = arith.constant 0.000000e+00 : f32
    %24 = vector.broadcast %cst_22 : f32 to vector<16x64xf32>
    %25 = arith.maximumf %23, %24 : vector<16x64xf32>
    %c0_23 = arith.constant 0 : index
    %c0_24 = arith.constant 0 : index
    %c0_25 = arith.constant 0 : index
    %26 = vector.load %arg10[%c0_23, %c0_24, %c0_25] : memref<1x16x64xf32, #tpu.memory_space<vmem>>, vector<1x16x64xf32>
    %27 = vector.shape_cast %26 : vector<1x16x64xf32> to vector<16x64xf32>
    %28 = vector.shape_cast %25 : vector<16x64xf32> to vector<1x16x64xf32>
    tpu.vector_store %arg10[%c0_23, %c0_24, %c0_25], %28 {strides = array<i32>} : memref<1x16x64xf32, #tpu.memory_space<vmem>>, vector<1x16x64xf32>,
    return
  }
  func.func @transform_0(%arg0: i32) -> (i32, i32, i32) {
    %c0_i32 = arith.constant 0 : i32
    %c0_i32_0 = arith.constant 0 : i32
    %c0_i32_1 = arith.constant 0 : i32
    return %arg0, %c0_i32, %c0_i32_0 : i32, i32, i32
  }
  func.func @transform_1(%arg0: i32) -> (i32, i32, i32) {
    %c0_i32 = arith.constant 0 : i32
    %c0_i32_0 = arith.constant 0 : i32
    %c0_i32_1 = arith.constant 0 : i32
    return %arg0, %c0_i32, %c0_i32_0 : i32, i32, i32
  }
  func.func @transform_2(%arg0: i32) -> (i32, i32) {
    %c0_i32 = arith.constant 0 : i32
    %c0_i32_0 = arith.constant 0 : i32
    %c0_i32_1 = arith.constant 0 : i32
    return %c0_i32, %c0_i32_0 : i32, i32
  }
  func.func @transform_3(%arg0: i32) -> (i32, i32) {
    %c0_i32 = arith.constant 0 : i32
    %c0_i32_0 = arith.constant 0 : i32
    %c0_i32_1 = arith.constant 0 : i32
    return %c0_i32, %c0_i32_0 : i32, i32
  }
  func.func @transform_4(%arg0: i32) -> (i32, i32) {
    %c0_i32 = arith.constant 0 : i32
    %c0_i32_0 = arith.constant 0 : i32
    %c0_i32_1 = arith.constant 0 : i32
    return %c0_i32, %c0_i32_0 : i32, i32
  }
  func.func @transform_5(%arg0: i32) -> (i32, i32) {
    %c0_i32 = arith.constant 0 : i32
    %c0_i32_0 = arith.constant 0 : i32
    %c0_i32_1 = arith.constant 0 : i32
    return %c0_i32, %c0_i32_0 : i32, i32
  }
  func.func @transform_6(%arg0: i32) -> (i32, i32) {
    %c0_i32 = arith.constant 0 : i32
    %c0_i32_0 = arith.constant 0 : i32
    %c0_i32_1 = arith.constant 0 : i32
    return %c0_i32, %c0_i32_0 : i32, i32
  }
  func.func @transform_7(%arg0: i32) -> (i32, i32) {
    %c0_i32 = arith.constant 0 : i32
    %c0_i32_0 = arith.constant 0 : i32
    %c0_i32_1 = arith.constant 0 : i32
    return %c0_i32, %c0_i32_0 : i32, i32
  }
  func.func @transform_8(%arg0: i32) -> (i32, i32) {
    %c0_i32 = arith.constant 0 : i32
    %c0_i32_0 = arith.constant 0 : i32
    %c0_i32_1 = arith.constant 0 : i32
    return %c0_i32, %c0_i32_0 : i32, i32
  }
  func.func @transform_9(%arg0: i32) -> (i32, i32, i32) {
    %c0_i32 = arith.constant 0 : i32
    %c0_i32_0 = arith.constant 0 : i32
    %c0_i32_1 = arith.constant 0 : i32
    return %arg0, %c0_i32, %c0_i32_0 : i32, i32, i32
  }
}

</mosaic_0001>

<llo_original>
// kernel: bottleneck_forward.3
$region0: #{bottleneck_forward.3}
  #allocation0 [shape = 'u32[]', space=smem, size = 0x4, offset = 0x4, fixed_abs, tag = 'smem constant byte address 0x4 - core index']
  #allocation1 [shape = 'u32[144,128]{1,0:T(1,128)}', space=vmem, size = 0x12000, scoped, tag = 'internal scratch']
  %s0 = inlined_call_operand.vmem [shape: f32[2,4,256], index: 0, kind: input, shape index: {}]
  %s1 = inlined_call_operand.vmem [shape: f32[8,4], index: 1, kind: input, shape index: {}]
  %s2 = inlined_call_operand.vmem [shape: f32[8,1], index: 2, kind: input, shape index: {}]
  %s3 = inlined_call_operand.vmem [shape: f32[8,1], index: 3, kind: input, shape index: {}]
  %s4 = inlined_call_operand.vmem [shape: f32[2,8,256], index: 4, kind: output, shape index: {}]
  %s5 = sld [smem:[#allocation0]]
  $region49: #{bottleneck_forward.3} parent=0
    _
  %s7 = ssub.s32 1, %s5
  %s8 = scalar_select 0, %s7, %s5
  loop: start=0, step=1, limit=4
  $region2: #{bottleneck_forward.3} parent=0 // loop_pre_header
    _
  $region3: #{bottleneck_forward.3} parent=0 // loop_header
    %s10 = sphi 0, %s14
    %p11 = scmp.ge.s32.totalorder %s10, 4
    %s17 = sphi 0, %s29
    %s18 = sphi 0, %s25
    %s19 = sphi 0, %s17
    %s20 = sphi 0, %s18
    %s21 = sphi 0, %s19
    %s22 = sphi 0, %s20
    %s34 = sphi 0, %s36
    %s37 = sphi 0, %s34
    %s38 = sphi 0, %s37
    %s54 = sphi 0, %s38
    %s58 = sphi 0, %s58
    %s60 = sphi 0, %s58
    %s61 = sphi 0, %s60
    %s75 = sphi 0, %s61
    %s79 = sphi 0, %s79
    %s81 = sphi 0, %s79
    %s82 = sphi 0, %s81
    %s96 = sphi 0, %s82
    %s100 = sphi 0, %s100
    %s102 = sphi 0, %s100
    %s103 = sphi 0, %s102
    %s117 = sphi 0, %s103
    %s125 = sphi 0, %s127
    %s128 = sphi 0, %s125
    %s129 = sphi 0, %s128
    %s145 = sphi 0, %s129
  $region4: #{bottleneck_forward.3} parent=0 // loop_header_branch
    %13 = sbr.rel (%p11) target = $region8
  $region5: #{bottleneck_forward.3} parent=0 // loop_body
    %s15 = ssub.s32 %s10, 1
    %s16 = ssub.s32 %s10, 2
    %s23 = sadd.s32 1, %s18
    %p24 = scmp.ge.s32.totalorder %s23, 1
    %s25 = scalar_select %p24, 0, %s23
    %s26 = sadd.s32 1, %s17
    %s27 = scalar_select %p24, %s26, %s17
    %p28 = scmp.ge.s32.totalorder %s27, 2
    %s29 = scalar_select %p28, 0, %s27
    %s30 = ssub.s32 %s17, %s29
    %s31 = ssub.s32 %s18, %s25
    %s32 = sor.u32 %s30, %s31
    %p33 = scmp.eq.s32.totalorder %s32, 0
    %s35 = sadd.s32 %s34, 1
    %s36 = scalar_select %p33, %s34, %s35
    %p39 = pneg %p33
    %p40 = scmp.eq.s32.totalorder %s10, 1
    %p41 = por %p39, %p40
    %p42 = scmp.ne.s32.totalorder %s34, %s37
    %p43 = scmp.eq.s32.totalorder %s10, 0
    %p44 = por %p42, %p43
    %p45 = scmp.ne.s32.totalorder %s34, %s37
    %p46 = scmp.eq.s32.totalorder %s15, 1
    %p47 = por %p45, %p46
    %p48 = scmp.ne.s32.totalorder %s37, %s38
    %p49 = scmp.eq.s32.totalorder %s15, 0
    %p50 = por %p48, %p49
    %p51 = scmp.ne.s32.totalorder %s37, %s38
    %p52 = scmp.eq.s32.totalorder %s16, 1
    %p53 = por %p51, %p52
    %p55 = scmp.ne.s32.totalorder %s38, %s54
    %p56 = scmp.eq.s32.totalorder %s16, 0
    %p57 = por %p55, %p56
    %s59 = sadd.s32 %s58, 1
    %p62 = scmp.eq.s32.totalorder %s10, 1
    %p63 = scmp.ne.s32.totalorder %s58, %s60
    %p64 = scmp.eq.s32.totalorder %s10, 0
    %p65 = por %p63, %p64
    %p66 = scmp.ne.s32.totalorder %s58, %s60
    %p67 = scmp.eq.s32.totalorder %s15, 1
    %p68 = por %p66, %p67
    %p69 = scmp.ne.s32.totalorder %s60, %s61
    %p70 = scmp.eq.s32.totalorder %s15, 0
    %p71 = por %p69, %p70
    %p72 = scmp.ne.s32.totalorder %s60, %s61
    %p73 = scmp.eq.s32.totalorder %s16, 1
    %p74 = por %p72, %p73
    %p76 = scmp.ne.s32.totalorder %s61, %s75
    %p77 = scmp.eq.s32.totalorder %s16, 0
    %p78 = por %p76, %p77
    %s80 = sadd.s32 %s79, 1
    %p83 = scmp.eq.s32.totalorder %s10, 1
    %p84 = scmp.ne.s32.totalorder %s79, %s81
    %p85 = scmp.eq.s32.totalorder %s10, 0
    %p86 = por %p84, %p85
    %p87 = scmp.ne.s32.totalorder %s79, %s81
    %p88 = scmp.eq.s32.totalorder %s15, 1
    %p89 = por %p87, %p88
    %p90 = scmp.ne.s32.totalorder %s81, %s82
    %p91 = scmp.eq.s32.totalorder %s15, 0
    %p92 = por %p90, %p91
    %p93 = scmp.ne.s32.totalorder %s81, %s82
    %p94 = scmp.eq.s32.totalorder %s16, 1
    %p95 = por %p93, %p94
    %p97 = scmp.ne.s32.totalorder %s82, %s96
    %p98 = scmp.eq.s32.totalorder %s16, 0
    %p99 = por %p97, %p98
    %s101 = sadd.s32 %s100, 1
    %p104 = scmp.eq.s32.totalorder %s10, 1
    %p105 = scmp.ne.s32.totalorder %s100, %s102
    %p106 = scmp.eq.s32.totalorder %s10, 0
    %p107 = por %p105, %p106
    %p108 = scmp.ne.s32.totalorder %s100, %s102
    %p109 = scmp.eq.s32.totalorder %s15, 1
    %p110 = por %p108, %p109
    %p111 = scmp.ne.s32.totalorder %s102, %s103
    %p112 = scmp.eq.s32.totalorder %s15, 0
    %p113 = por %p111, %p112
    %p114 = scmp.ne.s32.totalorder %s102, %s103
    %p115 = scmp.eq.s32.totalorder %s16, 1
    %p116 = por %p114, %p115
    %p118 = scmp.ne.s32.totalorder %s103, %s117
    %p119 = scmp.eq.s32.totalorder %s16, 0
    %p120 = por %p118, %p119
    %s121 = ssub.s32 %s17, %s29
    %s122 = ssub.s32 %s18, %s25
    %s123 = sor.u32 %s121, %s122
    %p124 = scmp.eq.s32.totalorder %s123, 0
    %s126 = sadd.s32 %s125, 1
    %s127 = scalar_select %p124, %s125, %s126
    %p130 = pneg %p124
    %p131 = scmp.eq.s32.totalorder %s10, 1
    %p132 = por %p130, %p131
    %p133 = scmp.ne.s32.totalorder %s125, %s128
    %p134 = scmp.eq.s32.totalorder %s10, 0
    %p135 = por %p133, %p134
    %p136 = scmp.ne.s32.totalorder %s125, %s128
    %p137 = scmp.eq.s32.totalorder %s15, 1
    %p138 = por %p136, %p137
    %p139 = scmp.ne.s32.totalorder %s128, %s129
    %p140 = scmp.eq.s32.totalorder %s15, 0
    %p141 = por %p139, %p140
    %p142 = scmp.ne.s32.totalorder %s128, %s129
    %p143 = scmp.eq.s32.totalorder %s16, 1
    %p144 = por %p142, %p143
    %p146 = scmp.ne.s32.totalorder %s129, %s145
    %p147 = scmp.eq.s32.totalorder %s16, 0
    %p148 = por %p146, %p147
    %p149 = scmp.le.s32.totalorder 1, %s10
    %p150 = scmp.lt.s32.totalorder %s10, 3
    %p151 = pnand %p149, %p150
    %p152 = pneg %p151
    // Predicated region
    $region9: #{bottleneck_forward.3} parent=5 // pred_check
      _
    $region10: #{bottleneck_forward.3} parent=5 // pred_check_branch
      %154 = sbr.rel (%p151) target = $region12
    $region11: #{bottleneck_forward.3} parent=5 // pred_region
      %s155 = ssub.s32 %s10, 1
      // Predicated region
      $region13: #{bottleneck_forward.3} parent=11 // pred_check
        %p156 = pneg %p71
      $region14: #{bottleneck_forward.3} parent=11 // pred_check_branch
        %158 = sbr.rel (%p156) target = $region16
      $region15: #{bottleneck_forward.3} parent=11 // pred_region
        _
      $region16: #{bottleneck_forward.3} parent=11 // pred_fallthru
        _
      // Predicated region
      $region17: #{bottleneck_forward.3} parent=11 // pred_check
        %p159 = pneg %p92
      $region18: #{bottleneck_forward.3} parent=11 // pred_check_branch
        %161 = sbr.rel (%p159) target = $region20
      $region19: #{bottleneck_forward.3} parent=11 // pred_region
        _
      $region20: #{bottleneck_forward.3} parent=11 // pred_fallthru
        _
      // Predicated region
      $region21: #{bottleneck_forward.3} parent=11 // pred_check
        %p162 = pneg %p113
      $region22: #{bottleneck_forward.3} parent=11 // pred_check_branch
        %164 = sbr.rel (%p162) target = $region24
      $region23: #{bottleneck_forward.3} parent=11 // pred_region
        _
      $region24: #{bottleneck_forward.3} parent=11 // pred_fallthru
        _
    $region12: #{bottleneck_forward.3} parent=5 // pred_fallthru
      _
    %p165 = scmp.lt.s32.totalorder %s10, 2
    // Predicated region
    $region25: #{bottleneck_forward.3} parent=5 // pred_check
      %p166 = pneg %p165
    $region26: #{bottleneck_forward.3} parent=5 // pred_check_branch
      %168 = sbr.rel (%p166) target = $region28
    $region27: #{bottleneck_forward.3} parent=5 // pred_region
      // Predicated region
      $region29: #{bottleneck_forward.3} parent=27 // pred_check
        %p169 = pneg %p44
      $region30: #{bottleneck_forward.3} parent=27 // pred_check_branch
        %171 = sbr.rel (%p169) target = $region32
      $region31: #{bottleneck_forward.3} parent=27 // pred_region
        %s172 = smul.u32 2, %s18
        %p173 = scmp.lt.s32.totalorder %s17, 1
        %s174 = scalar_select %p173, %s17, 1
        %p175 = scmp.lt.s32.totalorder %s172, 1
        %s176 = scalar_select %p175, %s172, 1
        %s177 = smul.addr %s174, 2
        %s178 = sadd.s32 %s176, %s177
        %s179 = smul.addr %s178, 4
        %s180 = scalar_lea.vmem %s0, %s179
        %s181 = smul.u32 2, %s18
      $region32: #{bottleneck_forward.3} parent=27 // pred_fallthru
        _
    $region28: #{bottleneck_forward.3} parent=5 // pred_fallthru
      _
    %p182 = scmp.le.s32.totalorder 1, %s10
    %p183 = scmp.lt.s32.totalorder %s10, 3
    %p184 = pnand %p182, %p183
    %p185 = pneg %p184
    // Predicated region
    $region33: #{bottleneck_forward.3} parent=5 // pred_check
      _
    $region34: #{bottleneck_forward.3} parent=5 // pred_check_branch
      %187 = sbr.rel (%p184) target = $region36
    $region35: #{bottleneck_forward.3} parent=5 // pred_region
      %s188 = ssub.s32 %s10, 1
      %s189 = smul.u32 2, %s20
      %p190 = scmp.lt.s32.totalorder %s19, 1
      %s191 = scalar_select %p190, %s19, 1
      %p192 = scmp.lt.s32.totalorder %s189, 1
      %s193 = scalar_select %p192, %s189, 1
      %s194 = smul.addr %s191, 2
      %s195 = sadd.s32 %s193, %s194
      %s196 = smul.addr %s195, 4
      %s197 = scalar_lea.vmem %s0, %s196
      %p198 = pneg %p50
      %p199 = pneg %p47
      %p200 = pneg %p71
      %p201 = pneg %p68
      %p202 = pneg %p92
      %p203 = pneg %p89
      %p204 = pneg %p113
      %p205 = pneg %p110
      %p206 = pneg %p141
      %p207 = pneg %p138
      %s208 = smul.u32 2, %s20
      %p209 = scmp.lt.s32.totalorder %s19, 1
      %s210 = scalar_select %p209, %s19, 1
      %p211 = scmp.lt.s32.totalorder %s208, 1
      %s212 = scalar_select %p211, %s208, 1
      %s213 = smul.addr %s210, 2
      %s214 = sadd.s32 %s212, %s213
      %s215 = smul.addr %s214, 8
      %s216 = scalar_lea.vmem %s4, %s215
      %s217 = smul.u32 2, %s20
      %p218 = scmp.lt.s32.totalorder %s19, 1
      %s219 = scalar_select %p218, %s19, 1
      %p220 = scmp.lt.s32.totalorder %s217, 1
      %s221 = scalar_select %p220, %s217, 1
      %s222 = smul.addr %s219, 2
      %s223 = sadd.s32 %s221, %s222
      %s224 = smul.addr %s223, 4
      %s225 = scalar_lea.vmem %s0, %s224
      %s226 = smul.u32 2, %s20
      %s227 = smul.u32 2, %s20
      %p228 = scmp.lt.s32.totalorder %s19, 1
      %s229 = scalar_select %p228, %s19, 1
      %p230 = scmp.lt.s32.totalorder %s227, 1
      %s231 = scalar_select %p230, %s227, 1
      %s232 = smul.addr %s229, 2
      %s233 = sadd.s32 %s231, %s232
      %s234 = smul.addr %s233, 8
      %s235 = scalar_lea.vmem %s4, %s234
      %s236 = smul.u32 2, %s20
      %v237 = vld [vmem:[%s1] sm:$0xff]
      %v238 = vld [vmem:[%s225] sm:$0xff]
      %v240 = vcombine.high %v238, %v238
      %vm241 = vcmask 31744
      %v243 = vsel %vm241, %v237, 0
      %vm245 = vcmask 1043456
      %v246 = vsel %vm245, %v238, 0
      %v248 = vsel %vm245, %v240, 0
      %250 = vmatprep.subr.mxu0 %v248
      %251 = vmatpush1.msra.mxu0 %v246
      %252 = vmatprep.subr.mxu0 0.0
      %253 = vmatpush1.msra.mxu0 0.0
      %254 = vmatprep.subr.mxu0 0.0
      %255 = vmatpush1.msra.mxu0 0.0
      %256 = vmatprep.subr.mxu0 0.0
      %257 = vmatpush1.msra.mxu0 0.0
      %258 = vmatprep.subr.mxu0 0.0
      %259 = vmatpush1.msra.mxu0 0.0
      %260 = vmatprep.subr.mxu0 0.0
      %261 = vmatpush1.msra.mxu0 0.0
      %262 = vmatprep.subr.mxu0 0.0
      %263 = vmatpush1.msra.mxu0 0.0
      %264 = vmatprep.subr.mxu0 0.0
      %265 = vmatpush1.msra.mxu0 0.0
      %266 = vmatprep.subr.mxu0 0.0
      %267 = vmatpush1.msra.mxu0 0.0
      %268 = vmatprep.subr.mxu0 0.0
      %269 = vmatpush1.msra.mxu0 0.0
      %270 = vmatprep.subr.mxu0 0.0
      %271 = vmatpush1.msra.mxu0 0.0
      %272 = vmatprep.subr.mxu0 0.0
      %273 = vmatpush1.msra.mxu0 0.0
      %274 = vmatprep.subr.mxu0 0.0
      %275 = vmatpush1.msra.mxu0 0.0
      %276 = vmatprep.subr.mxu0 0.0
      %277 = vmatpush1.msra.mxu0 0.0
      %278 = vmatprep.subr.mxu0 0.0
      %279 = vmatpush1.msra.mxu0 0.0
      %280 = vmatprep.subr.mxu0 0.0
      %281 = vmatpush1.msra.mxu0 0.0
      %282 = vmatprep.subr.mxu0 0.0
      %283 = vmatpush1.msra.mxu0 0.0
      %284 = vmatprep.subr.mxu0 0.0
      %285 = vmatpush1.msra.mxu0 0.0
      %286 = vmatprep.subr.mxu0 0.0
      %287 = vmatpush1.msra.mxu0 0.0
      %288 = vmatprep.subr.mxu0 0.0
      %289 = vmatpush1.msra.mxu0 0.0
      %290 = vmatprep.subr.mxu0 0.0
      %291 = vmatpush1.msra.mxu0 0.0
      %292 = vmatprep.subr.mxu0 0.0
      %293 = vmatpush1.msra.mxu0 0.0
      %294 = vmatprep.subr.mxu0 0.0
      %295 = vmatpush1.msra.mxu0 0.0
      %296 = vmatprep.subr.mxu0 0.0
      %297 = vmatpush1.msra.mxu0 0.0
      %298 = vmatprep.subr.mxu0 0.0
      %299 = vmatpush1.msra.mxu0 0.0
      %300 = vmatprep.subr.mxu0 0.0
      %301 = vmatpush1.msra.mxu0 0.0
      %302 = vmatprep.subr.mxu0 0.0
      %303 = vmatpush1.msra.mxu0 0.0
      %304 = vmatprep.subr.mxu0 0.0
      %305 = vmatpush1.msra.mxu0 0.0
      %306 = vmatprep.subr.mxu0 0.0
      %307 = vmatpush1.msra.mxu0 0.0
      %308 = vmatprep.subr.mxu0 0.0
      %309 = vmatpush1.msra.mxu0 0.0
      %310 = vmatprep.subr.mxu0 0.0
      %311 = vmatpush1.msra.mxu0 0.0
      %312 = vmatprep.subr.mxu0 0.0
      %313 = vmatpush1.msra.mxu0 0.0
      %314 = vmatprep.mubr.f32.mxu0 0.0
      %315 = vmatmul.mubr.f32.gmra.mrb[0].mxu0 %v243
      %v316 = vpop.f32.mrb[0].mxu0
      %v317 = vadd.f32 0.0, %v316
      %v318 = vpop.f32.mrb[0].mxu0
      %v319 = vadd.f32 0.0, %v318
      %320 = vdwg.mxu0
      %v321 = vld [vmem:[%s2] sm:$0xff]
      %323 = vset.pattern.permute.xlu0 0
      %324 = vperm.xlu0 %323, %v321
      %v325 = vpop.permute.xlu0 %324
      %v327 = vmul.f32 %v317, %v325
      %v328 = vmul.f32 %v319, %v325
      %v329 = vld [vmem:[%s3] sm:$0xff]
      %331 = vset.pattern.permute.xlu0 0
      %332 = vperm.xlu0 %331, %v329
      %v333 = vpop.permute.xlu0 %332
      %v335 = vadd.f32 %v327, %v333
      %v336 = vadd.f32 %v328, %v333
      %v337 = vmax.f32 %v335, 0.0
      %v338 = vmax.f32 %v336, 0.0
      %339 = vst [vmem:[%s235] sm:$0xff] %v337
      %340 = vst [vmem:[%s235 + $0x8] sm:$0xff] %v338
      %s341 = smul.u32 2, %s20
      %p342 = scmp.lt.s32.totalorder %s19, 1
      %s343 = scalar_select %p342, %s19, 1
      %p344 = scmp.lt.s32.totalorder %s341, 1
      %s345 = scalar_select %p344, %s341, 1
      %s346 = smul.addr %s343, 2
      %s347 = sadd.s32 %s345, %s346
      %s348 = smul.addr %s347, 8
      %s349 = scalar_lea.vmem %s4, %s348
      // Predicated region
      $region37: #{bottleneck_forward.3} parent=35 // pred_check
        %p350 = pneg %p138
      $region38: #{bottleneck_forward.3} parent=35 // pred_check_branch
        %352 = sbr.rel (%p350) target = $region40
      $region39: #{bottleneck_forward.3} parent=35 // pred_region
        %s353 = smul.u32 2, %s20
      $region40: #{bottleneck_forward.3} parent=35 // pred_fallthru
        _
    $region36: #{bottleneck_forward.3} parent=5 // pred_fallthru
      _
    %p354 = scmp.le.s32.totalorder 2, %s10
    // Predicated region
    $region41: #{bottleneck_forward.3} parent=5 // pred_check
      %p355 = pneg %p354
    $region42: #{bottleneck_forward.3} parent=5 // pred_check_branch
      %357 = sbr.rel (%p355) target = $region44
    $region43: #{bottleneck_forward.3} parent=5 // pred_region
      %s358 = ssub.s32 %s10, 2
      // Predicated region
      $region45: #{bottleneck_forward.3} parent=43 // pred_check
        %p359 = pneg %p144
      $region46: #{bottleneck_forward.3} parent=43 // pred_check_branch
        %361 = sbr.rel (%p359) target = $region48
      $region47: #{bottleneck_forward.3} parent=43 // pred_region
        %s362 = smul.u32 2, %s22
        %p363 = scmp.lt.s32.totalorder %s21, 1
        %s364 = scalar_select %p363, %s21, 1
        %p365 = scmp.lt.s32.totalorder %s362, 1
        %s366 = scalar_select %p365, %s362, 1
        %s367 = smul.addr %s364, 2
        %s368 = sadd.s32 %s366, %s367
        %s369 = smul.addr %s368, 8
        %s370 = scalar_lea.vmem %s4, %s369
      $region48: #{bottleneck_forward.3} parent=43 // pred_fallthru
        _
    $region44: #{bottleneck_forward.3} parent=5 // pred_fallthru
      _
  $region6: #{bottleneck_forward.3} parent=0 // loop_footer
    %s14 = sadd.s32 1, %s10
  $region7: #{bottleneck_forward.3} parent=0 // loop_footer_branch
    %9 = sbr.rel target = $region3
  $region8: #{bottleneck_forward.3} parent=0 // loop_exit
    _

// kernel: bottleneck_forward.4
$region0: #{bottleneck_forward.4}
  #allocation0 [shape = 'u32[]', space=smem, size = 0x4, offset = 0x4, fixed_abs, tag = 'smem constant byte address 0x4 - core index']
  #allocation1 [shape = 'u32[144,128]{1,0:T(1,128)}', space=vmem, size = 0x12000, scoped, tag = 'internal scratch']
  #allocation2 [shape = 'f32[72,256]{1,0:T(8,128)}', space=vmem, size = 0x12000, scoped, tag = 'scratch operand']
  %s0 = inlined_call_operand.vmem [shape: f32[2,8,256], index: 0, kind: input, shape index: {}]
  %s1 = inlined_call_operand.vmem [shape: f32[8,72], index: 1, kind: input, shape index: {}]
  %s2 = inlined_call_operand.vmem [shape: f32[8,1], index: 2, kind: input, shape index: {}]
  %s3 = inlined_call_operand.vmem [shape: f32[8,1], index: 3, kind: input, shape index: {}]
  %s4 = inlined_call_operand.vmem [shape: f32[9,256], index: 4, kind: input, shape index: {}]
  %s5 = inlined_call_operand.vmem [shape: f32[2,8,256], index: 5, kind: output, shape index: {}]
  %s6 = sld [smem:[#allocation0]]
  $region53: #{bottleneck_forward.4} parent=0
    _
  %s8 = ssub.s32 1, %s6
  %s9 = scalar_select 0, %s8, %s6
  loop: start=0, step=1, limit=4
  $region2: #{bottleneck_forward.4} parent=0 // loop_pre_header
    _
  $region3: #{bottleneck_forward.4} parent=0 // loop_header
    %s11 = sphi 0, %s15
    %p12 = scmp.ge.s32.totalorder %s11, 4
    %s21 = sphi 0, %s23
    %s24 = sphi 0, %s21
    %s25 = sphi 0, %s24
    %s41 = sphi 0, %s25
    %s45 = sphi 0, %s45
    %s47 = sphi 0, %s45
    %s48 = sphi 0, %s47
    %s62 = sphi 0, %s48
    %s66 = sphi 0, %s66
    %s68 = sphi 0, %s66
    %s69 = sphi 0, %s68
    %s83 = sphi 0, %s69
    %s87 = sphi 0, %s87
    %s89 = sphi 0, %s87
    %s90 = sphi 0, %s89
    %s104 = sphi 0, %s90
    %s108 = sphi 0, %s108
    %s110 = sphi 0, %s108
    %s111 = sphi 0, %s110
    %s125 = sphi 0, %s111
    %s131 = sphi 0, %s133
    %s134 = sphi 0, %s131
    %s135 = sphi 0, %s134
    %s151 = sphi 0, %s135
  $region4: #{bottleneck_forward.4} parent=0 // loop_header_branch
    %14 = sbr.rel (%p12) target = $region8
  $region5: #{bottleneck_forward.4} parent=0 // loop_body
    %s16 = ssub.s32 %s11, 1
    %s17 = ssub.s32 %s11, 2
    %s18 = sadd.s32 %s11, 1
    %s19 = ssub.s32 %s11, %s18
    %p20 = scmp.eq.s32.totalorder %s19, 0
    %s22 = sadd.s32 %s21, 1
    %s23 = scalar_select %p20, %s21, %s22
    %p26 = pneg %p20
    %p27 = scmp.eq.s32.totalorder %s11, 1
    %p28 = por %p26, %p27
    %p29 = scmp.ne.s32.totalorder %s21, %s24
    %p30 = scmp.eq.s32.totalorder %s11, 0
    %p31 = por %p29, %p30
    %p32 = scmp.ne.s32.totalorder %s21, %s24
    %p33 = scmp.eq.s32.totalorder %s16, 1
    %p34 = por %p32, %p33
    %p35 = scmp.ne.s32.totalorder %s24, %s25
    %p36 = scmp.eq.s32.totalorder %s16, 0
    %p37 = por %p35, %p36
    %p38 = scmp.ne.s32.totalorder %s24, %s25
    %p39 = scmp.eq.s32.totalorder %s17, 1
    %p40 = por %p38, %p39
    %p42 = scmp.ne.s32.totalorder %s25, %s41
    %p43 = scmp.eq.s32.totalorder %s17, 0
    %p44 = por %p42, %p43
    %s46 = sadd.s32 %s45, 1
    %p49 = scmp.eq.s32.totalorder %s11, 1
    %p50 = scmp.ne.s32.totalorder %s45, %s47
    %p51 = scmp.eq.s32.totalorder %s11, 0
    %p52 = por %p50, %p51
    %p53 = scmp.ne.s32.totalorder %s45, %s47
    %p54 = scmp.eq.s32.totalorder %s16, 1
    %p55 = por %p53, %p54
    %p56 = scmp.ne.s32.totalorder %s47, %s48
    %p57 = scmp.eq.s32.totalorder %s16, 0
    %p58 = por %p56, %p57
    %p59 = scmp.ne.s32.totalorder %s47, %s48
    %p60 = scmp.eq.s32.totalorder %s17, 1
    %p61 = por %p59, %p60
    %p63 = scmp.ne.s32.totalorder %s48, %s62
    %p64 = scmp.eq.s32.totalorder %s17, 0
    %p65 = por %p63, %p64
    %s67 = sadd.s32 %s66, 1
    %p70 = scmp.eq.s32.totalorder %s11, 1
    %p71 = scmp.ne.s32.totalorder %s66, %s68
    %p72 = scmp.eq.s32.totalorder %s11, 0
    %p73 = por %p71, %p72
    %p74 = scmp.ne.s32.totalorder %s66, %s68
    %p75 = scmp.eq.s32.totalorder %s16, 1
    %p76 = por %p74, %p75
    %p77 = scmp.ne.s32.totalorder %s68, %s69
    %p78 = scmp.eq.s32.totalorder %s16, 0
    %p79 = por %p77, %p78
    %p80 = scmp.ne.s32.totalorder %s68, %s69
    %p81 = scmp.eq.s32.totalorder %s17, 1
    %p82 = por %p80, %p81
    %p84 = scmp.ne.s32.totalorder %s69, %s83
    %p85 = scmp.eq.s32.totalorder %s17, 0
    %p86 = por %p84, %p85
    %s88 = sadd.s32 %s87, 1
    %p91 = scmp.eq.s32.totalorder %s11, 1
    %p92 = scmp.ne.s32.totalorder %s87, %s89
    %p93 = scmp.eq.s32.totalorder %s11, 0
    %p94 = por %p92, %p93
    %p95 = scmp.ne.s32.totalorder %s87, %s89
    %p96 = scmp.eq.s32.totalorder %s16, 1
    %p97 = por %p95, %p96
    %p98 = scmp.ne.s32.totalorder %s89, %s90
    %p99 = scmp.eq.s32.totalorder %s16, 0
    %p100 = por %p98, %p99
    %p101 = scmp.ne.s32.totalorder %s89, %s90
    %p102 = scmp.eq.s32.totalorder %s17, 1
    %p103 = por %p101, %p102
    %p105 = scmp.ne.s32.totalorder %s90, %s104
    %p106 = scmp.eq.s32.totalorder %s17, 0
    %p107 = por %p105, %p106
    %s109 = sadd.s32 %s108, 1
    %p112 = scmp.eq.s32.totalorder %s11, 1
    %p113 = scmp.ne.s32.totalorder %s108, %s110
    %p114 = scmp.eq.s32.totalorder %s11, 0
    %p115 = por %p113, %p114
    %p116 = scmp.ne.s32.totalorder %s108, %s110
    %p117 = scmp.eq.s32.totalorder %s16, 1
    %p118 = por %p116, %p117
    %p119 = scmp.ne.s32.totalorder %s110, %s111
    %p120 = scmp.eq.s32.totalorder %s16, 0
    %p121 = por %p119, %p120
    %p122 = scmp.ne.s32.totalorder %s110, %s111
    %p123 = scmp.eq.s32.totalorder %s17, 1
    %p124 = por %p122, %p123
    %p126 = scmp.ne.s32.totalorder %s111, %s125
    %p127 = scmp.eq.s32.totalorder %s17, 0
    %p128 = por %p126, %p127
    %s129 = ssub.s32 %s11, %s18
    %p130 = scmp.eq.s32.totalorder %s129, 0
    %s132 = sadd.s32 %s131, 1
    %s133 = scalar_select %p130, %s131, %s132
    %p136 = pneg %p130
    %p137 = scmp.eq.s32.totalorder %s11, 1
    %p138 = por %p136, %p137
    %p139 = scmp.ne.s32.totalorder %s131, %s134
    %p140 = scmp.eq.s32.totalorder %s11, 0
    %p141 = por %p139, %p140
    %p142 = scmp.ne.s32.totalorder %s131, %s134
    %p143 = scmp.eq.s32.totalorder %s16, 1
    %p144 = por %p142, %p143
    %p145 = scmp.ne.s32.totalorder %s134, %s135
    %p146 = scmp.eq.s32.totalorder %s16, 0
    %p147 = por %p145, %p146
    %p148 = scmp.ne.s32.totalorder %s134, %s135
    %p149 = scmp.eq.s32.totalorder %s17, 1
    %p150 = por %p148, %p149
    %p152 = scmp.ne.s32.totalorder %s135, %s151
    %p153 = scmp.eq.s32.totalorder %s17, 0
    %p154 = por %p152, %p153
    %p155 = scmp.le.s32.totalorder 1, %s11
    %p156 = scmp.lt.s32.totalorder %s11, 3
    %p157 = pnand %p155, %p156
    %p158 = pneg %p157
    // Predicated region
    $region9: #{bottleneck_forward.4} parent=5 // pred_check
      _
    $region10: #{bottleneck_forward.4} parent=5 // pred_check_branch
      %160 = sbr.rel (%p157) target = $region12
    $region11: #{bottleneck_forward.4} parent=5 // pred_region
      %s161 = ssub.s32 %s11, 1
      // Predicated region
      $region13: #{bottleneck_forward.4} parent=11 // pred_check
        %p162 = pneg %p58
      $region14: #{bottleneck_forward.4} parent=11 // pred_check_branch
        %164 = sbr.rel (%p162) target = $region16
      $region15: #{bottleneck_forward.4} parent=11 // pred_region
        _
      $region16: #{bottleneck_forward.4} parent=11 // pred_fallthru
        _
      // Predicated region
      $region17: #{bottleneck_forward.4} parent=11 // pred_check
        %p165 = pneg %p79
      $region18: #{bottleneck_forward.4} parent=11 // pred_check_branch
        %167 = sbr.rel (%p165) target = $region20
      $region19: #{bottleneck_forward.4} parent=11 // pred_region
        _
      $region20: #{bottleneck_forward.4} parent=11 // pred_fallthru
        _
      // Predicated region
      $region21: #{bottleneck_forward.4} parent=11 // pred_check
        %p168 = pneg %p100
      $region22: #{bottleneck_forward.4} parent=11 // pred_check_branch
        %170 = sbr.rel (%p168) target = $region24
      $region23: #{bottleneck_forward.4} parent=11 // pred_region
        _
      $region24: #{bottleneck_forward.4} parent=11 // pred_fallthru
        _
      // Predicated region
      $region25: #{bottleneck_forward.4} parent=11 // pred_check
        %p171 = pneg %p121
      $region26: #{bottleneck_forward.4} parent=11 // pred_check_branch
        %173 = sbr.rel (%p171) target = $region28
      $region27: #{bottleneck_forward.4} parent=11 // pred_region
        _
      $region28: #{bottleneck_forward.4} parent=11 // pred_fallthru
        _
    $region12: #{bottleneck_forward.4} parent=5 // pred_fallthru
      _
    %p174 = scmp.lt.s32.totalorder %s11, 2
    // Predicated region
    $region29: #{bottleneck_forward.4} parent=5 // pred_check
      %p175 = pneg %p174
    $region30: #{bottleneck_forward.4} parent=5 // pred_check_branch
      %177 = sbr.rel (%p175) target = $region32
    $region31: #{bottleneck_forward.4} parent=5 // pred_region
      // Predicated region
      $region33: #{bottleneck_forward.4} parent=31 // pred_check
        %p178 = pneg %p31
      $region34: #{bottleneck_forward.4} parent=31 // pred_check_branch
        %180 = sbr.rel (%p178) target = $region36
      $region35: #{bottleneck_forward.4} parent=31 // pred_region
        %p181 = scmp.lt.s32.totalorder %s11, 1
        %s182 = scalar_select %p181, %s11, 1
        %s183 = smul.addr %s182, 2
        %s184 = smul.addr %s183, 8
        %s185 = scalar_lea.vmem %s0, %s184
      $region36: #{bottleneck_forward.4} parent=31 // pred_fallthru
        _
    $region32: #{bottleneck_forward.4} parent=5 // pred_fallthru
      _
    %p186 = scmp.le.s32.totalorder 1, %s11
    %p187 = scmp.lt.s32.totalorder %s11, 3
    %p188 = pnand %p186, %p187
    %p189 = pneg %p188
    // Predicated region
    $region37: #{bottleneck_forward.4} parent=5 // pred_check
      _
    $region38: #{bottleneck_forward.4} parent=5 // pred_check_branch
      %191 = sbr.rel (%p188) target = $region40
    $region39: #{bottleneck_forward.4} parent=5 // pred_region
      %s192 = ssub.s32 %s11, 1
      %p193 = scmp.lt.s32.totalorder %s16, 1
      %s194 = scalar_select %p193, %s16, 1
      %s195 = smul.addr %s194, 2
      %s196 = smul.addr %s195, 8
      %s197 = scalar_lea.vmem %s0, %s196
      %p198 = pneg %p37
      %p199 = pneg %p34
      %p200 = pneg %p58
      %p201 = pneg %p55
      %p202 = pneg %p79
      %p203 = pneg %p76
      %p204 = pneg %p100
      %p205 = pneg %p97
      %p206 = pneg %p121
      %p207 = pneg %p118
      %p208 = pneg %p147
      %p209 = pneg %p144
      %p210 = scmp.lt.s32.totalorder %s16, 1
      %s211 = scalar_select %p210, %s16, 1
      %s212 = smul.addr %s211, 2
      %s213 = smul.addr %s212, 8
      %s214 = scalar_lea.vmem %s5, %s213
      %p215 = scmp.lt.s32.totalorder %s16, 1
      %s216 = scalar_select %p215, %s16, 1
      %s217 = smul.addr %s216, 2
      %s218 = smul.addr %s217, 8
      %s219 = scalar_lea.vmem %s0, %s218
      %p220 = scmp.lt.s32.totalorder %s16, 1
      %s221 = scalar_select %p220, %s16, 1
      %s222 = smul.addr %s221, 2
      %s223 = smul.addr %s222, 8
      %s224 = scalar_lea.vmem %s5, %s223
      %v225 = vld [vmem:[%s219] sm:$0xff]
      %v226 = vld [vmem:[%s219 + $0x8] sm:$0xff]
      %228 = vrot.lane.b32.xlu0 %v226, 17
      %v229 = vpop.permute.xlu0 %228
      %232 = vrot.lane.b32.xlu0 %v225, 17
      %v233 = vpop.permute.xlu0 %232
      %vm234 = vcmask 138240
      %v235 = vsel %vm234, %v233, %v229
      %v238 = vsel %vm234, %v229, %v233
      %v239 = vld [vmem:[%s4] ss:$8 sm:$0x3]
      %v241 = vlaneseq
      %v242 = vshrl.u32 %v241, 7
      %v243 = vsub.s32 0, %v242
      %v244 = vrot.slane %v239, %v243
      %v245 = vlaneseq
      %v246 = vshrl.u32 %v245, 7
      %v247 = vsub.s32 1, %v246
      %v248 = vrot.slane %v239, %v247
      %v251 = vmul.f32 %v238, %v244
      %v252 = vmul.f32 %v235, %v248
      %253 = vst [vmem:[#allocation2] sm:$0xff] %v251
      %254 = vst [vmem:[#allocation2 + $0x8] sm:$0xff] %v252
      %255 = vrot.lane.b32.xlu0 %v226, 16
      %v256 = vpop.permute.xlu0 %255
      %258 = vrot.lane.b32.xlu0 %v225, 16
      %v259 = vpop.permute.xlu0 %258
      %vm260 = vcmask 130048
      %v261 = vsel %vm260, %v259, %v256
      %v264 = vsel %vm260, %v256, %v259
      %s265 = scalar_lea.vmem %s4, 1
      %v266 = vld [vmem:[%s265] ss:$8 sm:$0x3]
      %v268 = vlaneseq
      %v269 = vshrl.u32 %v268, 7
      %v270 = vsub.s32 0, %v269
      %v271 = vrot.slane %v266, %v270
      %v272 = vlaneseq
      %v273 = vshrl.u32 %v272, 7
      %v274 = vsub.s32 1, %v273
      %v275 = vrot.slane %v266, %v274
      %v278 = vmul.f32 %v264, %v271
      %v279 = vmul.f32 %v261, %v275
      %280 = vst [vmem:[#allocation2 + $0x10] sm:$0xff] %v278
      %281 = vst [vmem:[#allocation2 + $0x18] sm:$0xff] %v279
      %282 = vrot.lane.b32.xlu0 %v226, 15
      %v283 = vpop.permute.xlu0 %282
      %285 = vrot.lane.b32.xlu0 %v225, 15
      %v286 = vpop.permute.xlu0 %285
      %vm287 = vcmask 121856
      %v288 = vsel %vm287, %v286, %v283
      %v291 = vsel %vm287, %v283, %v286
      %s292 = scalar_lea.vmem %s4, 2
      %v293 = vld [vmem:[%s292] ss:$8 sm:$0x3]
      %v295 = vlaneseq
      %v296 = vshrl.u32 %v295, 7
      %v297 = vsub.s32 0, %v296
      %v298 = vrot.slane %v293, %v297
      %v299 = vlaneseq
      %v300 = vshrl.u32 %v299, 7
      %v301 = vsub.s32 1, %v300
      %v302 = vrot.slane %v293, %v301
      %v305 = vmul.f32 %v291, %v298
      %v306 = vmul.f32 %v288, %v302
      %307 = vst [vmem:[#allocation2 + $0x20] sm:$0xff] %v305
      %308 = vst [vmem:[#allocation2 + $0x28] sm:$0xff] %v306
      %309 = vrot.lane.b32.xlu0 %v226, 1
      %v310 = vpop.permute.xlu0 %309
      %312 = vrot.lane.b32.xlu0 %v225, 1
      %v313 = vpop.permute.xlu0 %312
      %vm314 = vcmask 7168
      %v315 = vsel %vm314, %v313, %v310
      %v318 = vsel %vm314, %v310, %v313
      %s319 = scalar_lea.vmem %s4, 3
      %v320 = vld [vmem:[%s319] ss:$8 sm:$0x3]
      %v322 = vlaneseq
      %v323 = vshrl.u32 %v322, 7
      %v324 = vsub.s32 0, %v323
      %v325 = vrot.slane %v320, %v324
      %v326 = vlaneseq
      %v327 = vshrl.u32 %v326, 7
      %v328 = vsub.s32 1, %v327
      %v329 = vrot.slane %v320, %v328
      %v332 = vmul.f32 %v318, %v325
      %v333 = vmul.f32 %v315, %v329
      %334 = vst [vmem:[#allocation2 + $0x30] sm:$0xff] %v332
      %335 = vst [vmem:[#allocation2 + $0x38] sm:$0xff] %v333
      %s336 = scalar_lea.vmem %s4, 4
      %v337 = vld [vmem:[%s336] ss:$8 sm:$0x3]
      %v339 = vlaneseq
      %v340 = vshrl.u32 %v339, 7
      %v341 = vsub.s32 0, %v340
      %v342 = vrot.slane %v337, %v341
      %v343 = vlaneseq
      %v344 = vshrl.u32 %v343, 7
      %v345 = vsub.s32 1, %v344
      %v346 = vrot.slane %v337, %v345
      %v349 = vmul.f32 %v225, %v342
      %v350 = vmul.f32 %v226, %v346
      %351 = vst [vmem:[#allocation2 + $0x40] sm:$0xff] %v349
      %352 = vst [vmem:[#allocation2 + $0x48] sm:$0xff] %v350
      %353 = vrot.lane.b32.xlu0 %v225, 127
      %v354 = vpop.permute.xlu0 %353
      %355 = vrot.lane.b32.xlu0 %v226, 127
      %v356 = vpop.permute.xlu0 %355
      %vm357 = vcmask 1039360
      %v358 = vsel %vm357, %v354, %v356
      %v362 = vsel %vm357, %v356, %v354
      %s363 = scalar_lea.vmem %s4, 5
      %v364 = vld [vmem:[%s363] ss:$8 sm:$0x3]
      %v366 = vlaneseq
      %v367 = vshrl.u32 %v366, 7
      %v368 = vsub.s32 0, %v367
      %v369 = vrot.slane %v364, %v368
      %v370 = vlaneseq
      %v371 = vshrl.u32 %v370, 7
      %v372 = vsub.s32 1, %v371
      %v373 = vrot.slane %v364, %v372
      %v376 = vmul.f32 %v358, %v369
      %v377 = vmul.f32 %v362, %v373
      %378 = vst [vmem:[#allocation2 + $0x50] sm:$0xff] %v376
      %379 = vst [vmem:[#allocation2 + $0x58] sm:$0xff] %v377
      %380 = vrot.lane.b32.xlu0 %v225, 113
      %v381 = vpop.permute.xlu0 %380
      %382 = vrot.lane.b32.xlu0 %v226, 113
      %v383 = vpop.permute.xlu0 %382
      %vm384 = vcmask 924672
      %v385 = vsel %vm384, %v381, %v383
      %v389 = vsel %vm384, %v383, %v381
      %s390 = scalar_lea.vmem %s4, 6
      %v391 = vld [vmem:[%s390] ss:$8 sm:$0x3]
      %v393 = vlaneseq
      %v394 = vshrl.u32 %v393, 7
      %v395 = vsub.s32 0, %v394
      %v396 = vrot.slane %v391, %v395
      %v397 = vlaneseq
      %v398 = vshrl.u32 %v397, 7
      %v399 = vsub.s32 1, %v398
      %v400 = vrot.slane %v391, %v399
      %v403 = vmul.f32 %v385, %v396
      %v404 = vmul.f32 %v389, %v400
      %405 = vst [vmem:[#allocation2 + $0x60] sm:$0xff] %v403
      %406 = vst [vmem:[#allocation2 + $0x68] sm:$0xff] %v404
      %407 = vrot.lane.b32.xlu0 %v225, 112
      %v408 = vpop.permute.xlu0 %407
      %409 = vrot.lane.b32.xlu0 %v226, 112
      %v410 = vpop.permute.xlu0 %409
      %vm411 = vcmask 916480
      %v412 = vsel %vm411, %v408, %v410
      %v416 = vsel %vm411, %v410, %v408
      %s417 = scalar_lea.vmem %s4, 7
      %v418 = vld [vmem:[%s417] ss:$8 sm:$0x3]
      %v420 = vlaneseq
      %v421 = vshrl.u32 %v420, 7
      %v422 = vsub.s32 0, %v421
      %v423 = vrot.slane %v418, %v422
      %v424 = vlaneseq
      %v425 = vshrl.u32 %v424, 7
      %v426 = vsub.s32 1, %v425
      %v427 = vrot.slane %v418, %v426
      %v430 = vmul.f32 %v412, %v423
      %v431 = vmul.f32 %v416, %v427
      %432 = vst [vmem:[#allocation2 + $0x70] sm:$0xff] %v430
      %433 = vst [vmem:[#allocation2 + $0x78] sm:$0xff] %v431
      %434 = vrot.lane.b32.xlu0 %v225, 111
      %v435 = vpop.permute.xlu0 %434
      %436 = vrot.lane.b32.xlu0 %v226, 111
      %v437 = vpop.permute.xlu0 %436
      %vm438 = vcmask 908288
      %v439 = vsel %vm438, %v435, %v437
      %v443 = vsel %vm438, %v437, %v435
      %s444 = scalar_lea.vmem %s4, 16
      %v445 = vld [vmem:[%s444] ss:$8 sm:$0x3]
      %v447 = vlaneseq
      %v448 = vshrl.u32 %v447, 7
      %v449 = vsub.s32 0, %v448
      %v450 = vrot.slane %v445, %v449
      %v451 = vlaneseq
      %v452 = vshrl.u32 %v451, 7
      %v453 = vsub.s32 1, %v452
      %v454 = vrot.slane %v445, %v453
      %v457 = vmul.f32 %v439, %v450
      %v458 = vmul.f32 %v443, %v454
      %459 = vst [vmem:[#allocation2 + $0x80] sm:$0xff] %v457
      %460 = vst [vmem:[#allocation2 + $0x88] sm:$0xff] %v458
      %v461 = vld [vmem:[%s1] sm:$0xff]
      %v462 = vld [vmem:[#allocation2] sm:$0xff]
      %v463 = vld [vmem:[#allocation2 + $0x8] sm:$0xff]
      %v464 = vld [vmem:[#allocation2 + $0x10] sm:$0xff]
      %v465 = vld [vmem:[#allocation2 + $0x18] sm:$0xff]
      %v466 = vld [vmem:[#allocation2 + $0x20] sm:$0xff]
      %v467 = vld [vmem:[#allocation2 + $0x28] sm:$0xff]
      %v468 = vld [vmem:[#allocation2 + $0x30] sm:$0xff]
      %v469 = vld [vmem:[#allocation2 + $0x38] sm:$0xff]
      %v470 = vld [vmem:[#allocation2 + $0x40] sm:$0xff]
      %v471 = vld [vmem:[#allocation2 + $0x48] sm:$0xff]
      %v472 = vld [vmem:[#allocation2 + $0x50] sm:$0xff]
      %v473 = vld [vmem:[#allocation2 + $0x58] sm:$0xff]
      %v474 = vld [vmem:[#allocation2 + $0x60] sm:$0xff]
      %v475 = vld [vmem:[#allocation2 + $0x68] sm:$0xff]
      %v476 = vld [vmem:[#allocation2 + $0x70] sm:$0xff]
      %v477 = vld [vmem:[#allocation2 + $0x78] sm:$0xff]
      %v478 = vld [vmem:[#allocation2 + $0x80] sm:$0xff]
      %v479 = vld [vmem:[#allocation2 + $0x88] sm:$0xff]
      %vm480 = vcmask 588800
      %v482 = vsel %vm480, %v461, 0
      %484 = vmatprep.subr.mxu0 %v463
      %485 = vmatpush1.msra.mxu0 %v462
      %486 = vmatprep.subr.mxu0 %v465
      %487 = vmatpush1.msra.mxu0 %v464
      %488 = vmatprep.subr.mxu0 %v467
      %489 = vmatpush1.msra.mxu0 %v466
      %490 = vmatprep.subr.mxu0 %v469
      %491 = vmatpush1.msra.mxu0 %v468
      %492 = vmatprep.subr.mxu0 %v471
      %493 = vmatpush1.msra.mxu0 %v470
      %494 = vmatprep.subr.mxu0 %v473
      %495 = vmatpush1.msra.mxu0 %v472
      %496 = vmatprep.subr.mxu0 %v475
      %497 = vmatpush1.msra.mxu0 %v474
      %498 = vmatprep.subr.mxu0 %v477
      %499 = vmatpush1.msra.mxu0 %v476
      %500 = vmatprep.subr.mxu0 %v479
      %501 = vmatpush1.msra.mxu0 %v478
      %502 = vmatprep.subr.mxu0 0.0
      %503 = vmatpush1.msra.mxu0 0.0
      %504 = vmatprep.subr.mxu0 0.0
      %505 = vmatpush1.msra.mxu0 0.0
      %506 = vmatprep.subr.mxu0 0.0
      %507 = vmatpush1.msra.mxu0 0.0
      %508 = vmatprep.subr.mxu0 0.0
      %509 = vmatpush1.msra.mxu0 0.0
      %510 = vmatprep.subr.mxu0 0.0
      %511 = vmatpush1.msra.mxu0 0.0
      %512 = vmatprep.subr.mxu0 0.0
      %513 = vmatpush1.msra.mxu0 0.0
      %514 = vmatprep.subr.mxu0 0.0
      %515 = vmatpush1.msra.mxu0 0.0
      %516 = vmatprep.subr.mxu0 0.0
      %517 = vmatpush1.msra.mxu0 0.0
      %518 = vmatprep.subr.mxu0 0.0
      %519 = vmatpush1.msra.mxu0 0.0
      %520 = vmatprep.subr.mxu0 0.0
      %521 = vmatpush1.msra.mxu0 0.0
      %522 = vmatprep.subr.mxu0 0.0
      %523 = vmatpush1.msra.mxu0 0.0
      %524 = vmatprep.subr.mxu0 0.0
      %525 = vmatpush1.msra.mxu0 0.0
      %526 = vmatprep.subr.mxu0 0.0
      %527 = vmatpush1.msra.mxu0 0.0
      %528 = vmatprep.subr.mxu0 0.0
      %529 = vmatpush1.msra.mxu0 0.0
      %530 = vmatprep.subr.mxu0 0.0
      %531 = vmatpush1.msra.mxu0 0.0
      %532 = vmatprep.subr.mxu0 0.0
      %533 = vmatpush1.msra.mxu0 0.0
      %534 = vmatprep.subr.mxu0 0.0
      %535 = vmatpush1.msra.mxu0 0.0
      %536 = vmatprep.subr.mxu0 0.0
      %537 = vmatpush1.msra.mxu0 0.0
      %538 = vmatprep.subr.mxu0 0.0
      %539 = vmatpush1.msra.mxu0 0.0
      %540 = vmatprep.subr.mxu0 0.0
      %541 = vmatpush1.msra.mxu0 0.0
      %542 = vmatprep.subr.mxu0 0.0
      %543 = vmatpush1.msra.mxu0 0.0
      %544 = vmatprep.subr.mxu0 0.0
      %545 = vmatpush1.msra.mxu0 0.0
      %546 = vmatprep.subr.mxu0 0.0
      %547 = vmatpush1.msra.mxu0 0.0
      %548 = vmatprep.mubr.f32.mxu0 0.0
      %549 = vmatmul.mubr.f32.gmra.mrb[0].mxu0 %v482
      %v550 = vpop.f32.mrb[0].mxu0
      %v551 = vadd.f32 0.0, %v550
      %v552 = vpop.f32.mrb[0].mxu0
      %v553 = vadd.f32 0.0, %v552
      %554 = vdwg.mxu0
      %v555 = vld [vmem:[%s2] sm:$0xff]
      %557 = vset.pattern.permute.xlu0 0
      %558 = vperm.xlu0 %557, %v555
      %v559 = vpop.permute.xlu0 %558
      %v561 = vmul.f32 %v551, %v559
      %v562 = vmul.f32 %v553, %v559
      %v563 = vld [vmem:[%s3] sm:$0xff]
      %565 = vset.pattern.permute.xlu0 0
      %566 = vperm.xlu0 %565, %v563
      %v567 = vpop.permute.xlu0 %566
      %v569 = vadd.f32 %v561, %v567
      %v570 = vadd.f32 %v562, %v567
      %v571 = vmax.f32 %v569, 0.0
      %v572 = vmax.f32 %v570, 0.0
      %573 = vst [vmem:[%s224] sm:$0xff] %v571
      %574 = vst [vmem:[%s224 + $0x8] sm:$0xff] %v572
      %p575 = scmp.lt.s32.totalorder %s16, 1
      %s576 = scalar_select %p575, %s16, 1
      %s577 = smul.addr %s576, 2
      %s578 = smul.addr %s577, 8
      %s579 = scalar_lea.vmem %s5, %s578
      // Predicated region
      $region41: #{bottleneck_forward.4} parent=39 // pred_check
        %p580 = pneg %p144
      $region42: #{bottleneck_forward.4} parent=39 // pred_check_branch
        %582 = sbr.rel (%p580) target = $region44
      $region43: #{bottleneck_forward.4} parent=39 // pred_region
        _
      $region44: #{bottleneck_forward.4} parent=39 // pred_fallthru
        _
    $region40: #{bottleneck_forward.4} parent=5 // pred_fallthru
      _
    %p583 = scmp.le.s32.totalorder 2, %s11
    // Predicated region
    $region45: #{bottleneck_forward.4} parent=5 // pred_check
      %p584 = pneg %p583
    $region46: #{bottleneck_forward.4} parent=5 // pred_check_branch
      %586 = sbr.rel (%p584) target = $region48
    $region47: #{bottleneck_forward.4} parent=5 // pred_region
      %s587 = ssub.s32 %s11, 2
      // Predicated region
      $region49: #{bottleneck_forward.4} parent=47 // pred_check
        %p588 = pneg %p150
      $region50: #{bottleneck_forward.4} parent=47 // pred_check_branch
        %590 = sbr.rel (%p588) target = $region52
      $region51: #{bottleneck_forward.4} parent=47 // pred_region
        %p591 = scmp.lt.s32.totalorder %s17, 1
        %s592 = scalar_select %p591, %s17, 1
        %s593 = smul.addr %s592, 2
        %s594 = smul.addr %s593, 8
        %s595 = scalar_lea.vmem %s5, %s594
      $region52: #{bottleneck_forward.4} parent=47 // pred_fallthru
        _
    $region48: #{bottleneck_forward.4} parent=5 // pred_fallthru
      _
  $region6: #{bottleneck_forward.4} parent=0 // loop_footer
    %s15 = sadd.s32 1, %s11
  $region7: #{bottleneck_forward.4} parent=0 // loop_footer_branch
    %10 = sbr.rel target = $region3
  $region8: #{bottleneck_forward.4} parent=0 // loop_exit
    _

// kernel: bottleneck_forward.5
$region0: #{bottleneck_forward.5}
  #allocation0 [shape = 'u32[]', space=smem, size = 0x4, offset = 0x4, fixed_abs, tag = 'smem constant byte address 0x4 - core index']
  #allocation1 [shape = 'u32[144,128]{1,0:T(1,128)}', space=vmem, size = 0x12000, scoped, tag = 'internal scratch']
  %s0 = inlined_call_operand.vmem [shape: f32[2,8,256], index: 0, kind: input, shape index: {}]
  %s1 = inlined_call_operand.vmem [shape: f32[2,4,256], index: 1, kind: input, shape index: {}]
  %s2 = inlined_call_operand.vmem [shape: f32[16,8], index: 2, kind: input, shape index: {}]
  %s3 = inlined_call_operand.vmem [shape: f32[16,1], index: 3, kind: input, shape index: {}]
  %s4 = inlined_call_operand.vmem [shape: f32[16,1], index: 4, kind: input, shape index: {}]
  %s5 = inlined_call_operand.vmem [shape: f32[256,64], index: 5, kind: input, shape index: {}]
  %s6 = inlined_call_operand.vmem [shape: f32[16,4], index: 6, kind: input, shape index: {}]
  %s7 = inlined_call_operand.vmem [shape: f32[16,1], index: 7, kind: input, shape index: {}]
  %s8 = inlined_call_operand.vmem [shape: f32[16,1], index: 8, kind: input, shape index: {}]
  %s9 = inlined_call_operand.vmem [shape: f32[2,16,64], index: 9, kind: output, shape index: {}]
  %s10 = sld [smem:[#allocation0]]
  $region69: #{bottleneck_forward.5} parent=0
    _
  %s12 = ssub.s32 1, %s10
  %s13 = scalar_select 0, %s12, %s10
  loop: start=0, step=1, limit=4
  $region2: #{bottleneck_forward.5} parent=0 // loop_pre_header
    _
  $region3: #{bottleneck_forward.5} parent=0 // loop_header
    %s15 = sphi 0, %s19
    %p16 = scmp.ge.s32.totalorder %s15, 4
    %s25 = sphi 0, %s27
    %s28 = sphi 0, %s25
    %s29 = sphi 0, %s28
    %s45 = sphi 0, %s29
    %s51 = sphi 0, %s53
    %s54 = sphi 0, %s51
    %s55 = sphi 0, %s54
    %s71 = sphi 0, %s55
    %s75 = sphi 0, %s75
    %s77 = sphi 0, %s75
    %s78 = sphi 0, %s77
    %s92 = sphi 0, %s78
    %s96 = sphi 0, %s96
    %s98 = sphi 0, %s96
    %s99 = sphi 0, %s98
    %s113 = sphi 0, %s99
    %s117 = sphi 0, %s117
    %s119 = sphi 0, %s117
    %s120 = sphi 0, %s119
    %s134 = sphi 0, %s120
    %s138 = sphi 0, %s138
    %s140 = sphi 0, %s138
    %s141 = sphi 0, %s140
    %s155 = sphi 0, %s141
    %s159 = sphi 0, %s159
    %s161 = sphi 0, %s159
    %s162 = sphi 0, %s161
    %s176 = sphi 0, %s162
    %s180 = sphi 0, %s180
    %s182 = sphi 0, %s180
    %s183 = sphi 0, %s182
    %s197 = sphi 0, %s183
    %s201 = sphi 0, %s201
    %s203 = sphi 0, %s201
    %s204 = sphi 0, %s203
    %s218 = sphi 0, %s204
    %s224 = sphi 0, %s226
    %s227 = sphi 0, %s224
    %s228 = sphi 0, %s227
    %s244 = sphi 0, %s228
  $region4: #{bottleneck_forward.5} parent=0 // loop_header_branch
    %18 = sbr.rel (%p16) target = $region8
  $region5: #{bottleneck_forward.5} parent=0 // loop_body
    %s20 = ssub.s32 %s15, 1
    %s21 = ssub.s32 %s15, 2
    %s22 = sadd.s32 %s15, 1
    %s23 = ssub.s32 %s15, %s22
    %p24 = scmp.eq.s32.totalorder %s23, 0
    %s26 = sadd.s32 %s25, 1
    %s27 = scalar_select %p24, %s25, %s26
    %p30 = pneg %p24
    %p31 = scmp.eq.s32.totalorder %s15, 1
    %p32 = por %p30, %p31
    %p33 = scmp.ne.s32.totalorder %s25, %s28
    %p34 = scmp.eq.s32.totalorder %s15, 0
    %p35 = por %p33, %p34
    %p36 = scmp.ne.s32.totalorder %s25, %s28
    %p37 = scmp.eq.s32.totalorder %s20, 1
    %p38 = por %p36, %p37
    %p39 = scmp.ne.s32.totalorder %s28, %s29
    %p40 = scmp.eq.s32.totalorder %s20, 0
    %p41 = por %p39, %p40
    %p42 = scmp.ne.s32.totalorder %s28, %s29
    %p43 = scmp.eq.s32.totalorder %s21, 1
    %p44 = por %p42, %p43
    %p46 = scmp.ne.s32.totalorder %s29, %s45
    %p47 = scmp.eq.s32.totalorder %s21, 0
    %p48 = por %p46, %p47
    %s49 = ssub.s32 %s15, %s22
    %p50 = scmp.eq.s32.totalorder %s49, 0
    %s52 = sadd.s32 %s51, 1
    %s53 = scalar_select %p50, %s51, %s52
    %p56 = pneg %p50
    %p57 = scmp.eq.s32.totalorder %s15, 1
    %p58 = por %p56, %p57
    %p59 = scmp.ne.s32.totalorder %s51, %s54
    %p60 = scmp.eq.s32.totalorder %s15, 0
    %p61 = por %p59, %p60
    %p62 = scmp.ne.s32.totalorder %s51, %s54
    %p63 = scmp.eq.s32.totalorder %s20, 1
    %p64 = por %p62, %p63
    %p65 = scmp.ne.s32.totalorder %s54, %s55
    %p66 = scmp.eq.s32.totalorder %s20, 0
    %p67 = por %p65, %p66
    %p68 = scmp.ne.s32.totalorder %s54, %s55
    %p69 = scmp.eq.s32.totalorder %s21, 1
    %p70 = por %p68, %p69
    %p72 = scmp.ne.s32.totalorder %s55, %s71
    %p73 = scmp.eq.s32.totalorder %s21, 0
    %p74 = por %p72, %p73
    %s76 = sadd.s32 %s75, 1
    %p79 = scmp.eq.s32.totalorder %s15, 1
    %p80 = scmp.ne.s32.totalorder %s75, %s77
    %p81 = scmp.eq.s32.totalorder %s15, 0
    %p82 = por %p80, %p81
    %p83 = scmp.ne.s32.totalorder %s75, %s77
    %p84 = scmp.eq.s32.totalorder %s20, 1
    %p85 = por %p83, %p84
    %p86 = scmp.ne.s32.totalorder %s77, %s78
    %p87 = scmp.eq.s32.totalorder %s20, 0
    %p88 = por %p86, %p87
    %p89 = scmp.ne.s32.totalorder %s77, %s78
    %p90 = scmp.eq.s32.totalorder %s21, 1
    %p91 = por %p89, %p90
    %p93 = scmp.ne.s32.totalorder %s78, %s92
    %p94 = scmp.eq.s32.totalorder %s21, 0
    %p95 = por %p93, %p94
    %s97 = sadd.s32 %s96, 1
    %p100 = scmp.eq.s32.totalorder %s15, 1
    %p101 = scmp.ne.s32.totalorder %s96, %s98
    %p102 = scmp.eq.s32.totalorder %s15, 0
    %p103 = por %p101, %p102
    %p104 = scmp.ne.s32.totalorder %s96, %s98
    %p105 = scmp.eq.s32.totalorder %s20, 1
    %p106 = por %p104, %p105
    %p107 = scmp.ne.s32.totalorder %s98, %s99
    %p108 = scmp.eq.s32.totalorder %s20, 0
    %p109 = por %p107, %p108
    %p110 = scmp.ne.s32.totalorder %s98, %s99
    %p111 = scmp.eq.s32.totalorder %s21, 1
    %p112 = por %p110, %p111
    %p114 = scmp.ne.s32.totalorder %s99, %s113
    %p115 = scmp.eq.s32.totalorder %s21, 0
    %p116 = por %p114, %p115
    %s118 = sadd.s32 %s117, 1
    %p121 = scmp.eq.s32.totalorder %s15, 1
    %p122 = scmp.ne.s32.totalorder %s117, %s119
    %p123 = scmp.eq.s32.totalorder %s15, 0
    %p124 = por %p122, %p123
    %p125 = scmp.ne.s32.totalorder %s117, %s119
    %p126 = scmp.eq.s32.totalorder %s20, 1
    %p127 = por %p125, %p126
    %p128 = scmp.ne.s32.totalorder %s119, %s120
    %p129 = scmp.eq.s32.totalorder %s20, 0
    %p130 = por %p128, %p129
    %p131 = scmp.ne.s32.totalorder %s119, %s120
    %p132 = scmp.eq.s32.totalorder %s21, 1
    %p133 = por %p131, %p132
    %p135 = scmp.ne.s32.totalorder %s120, %s134
    %p136 = scmp.eq.s32.totalorder %s21, 0
    %p137 = por %p135, %p136
    %s139 = sadd.s32 %s138, 1
    %p142 = scmp.eq.s32.totalorder %s15, 1
    %p143 = scmp.ne.s32.totalorder %s138, %s140
    %p144 = scmp.eq.s32.totalorder %s15, 0
    %p145 = por %p143, %p144
    %p146 = scmp.ne.s32.totalorder %s138, %s140
    %p147 = scmp.eq.s32.totalorder %s20, 1
    %p148 = por %p146, %p147
    %p149 = scmp.ne.s32.totalorder %s140, %s141
    %p150 = scmp.eq.s32.totalorder %s20, 0
    %p151 = por %p149, %p150
    %p152 = scmp.ne.s32.totalorder %s140, %s141
    %p153 = scmp.eq.s32.totalorder %s21, 1
    %p154 = por %p152, %p153
    %p156 = scmp.ne.s32.totalorder %s141, %s155
    %p157 = scmp.eq.s32.totalorder %s21, 0
    %p158 = por %p156, %p157
    %s160 = sadd.s32 %s159, 1
    %p163 = scmp.eq.s32.totalorder %s15, 1
    %p164 = scmp.ne.s32.totalorder %s159, %s161
    %p165 = scmp.eq.s32.totalorder %s15, 0
    %p166 = por %p164, %p165
    %p167 = scmp.ne.s32.totalorder %s159, %s161
    %p168 = scmp.eq.s32.totalorder %s20, 1
    %p169 = por %p167, %p168
    %p170 = scmp.ne.s32.totalorder %s161, %s162
    %p171 = scmp.eq.s32.totalorder %s20, 0
    %p172 = por %p170, %p171
    %p173 = scmp.ne.s32.totalorder %s161, %s162
    %p174 = scmp.eq.s32.totalorder %s21, 1
    %p175 = por %p173, %p174
    %p177 = scmp.ne.s32.totalorder %s162, %s176
    %p178 = scmp.eq.s32.totalorder %s21, 0
    %p179 = por %p177, %p178
    %s181 = sadd.s32 %s180, 1
    %p184 = scmp.eq.s32.totalorder %s15, 1
    %p185 = scmp.ne.s32.totalorder %s180, %s182
    %p186 = scmp.eq.s32.totalorder %s15, 0
    %p187 = por %p185, %p186
    %p188 = scmp.ne.s32.totalorder %s180, %s182
    %p189 = scmp.eq.s32.totalorder %s20, 1
    %p190 = por %p188, %p189
    %p191 = scmp.ne.s32.totalorder %s182, %s183
    %p192 = scmp.eq.s32.totalorder %s20, 0
    %p193 = por %p191, %p192
    %p194 = scmp.ne.s32.totalorder %s182, %s183
    %p195 = scmp.eq.s32.totalorder %s21, 1
    %p196 = por %p194, %p195
    %p198 = scmp.ne.s32.totalorder %s183, %s197
    %p199 = scmp.eq.s32.totalorder %s21, 0
    %p200 = por %p198, %p199
    %s202 = sadd.s32 %s201, 1
    %p205 = scmp.eq.s32.totalorder %s15, 1
    %p206 = scmp.ne.s32.totalorder %s201, %s203
    %p207 = scmp.eq.s32.totalorder %s15, 0
    %p208 = por %p206, %p207
    %p209 = scmp.ne.s32.totalorder %s201, %s203
    %p210 = scmp.eq.s32.totalorder %s20, 1
    %p211 = por %p209, %p210
    %p212 = scmp.ne.s32.totalorder %s203, %s204
    %p213 = scmp.eq.s32.totalorder %s20, 0
    %p214 = por %p212, %p213
    %p215 = scmp.ne.s32.totalorder %s203, %s204
    %p216 = scmp.eq.s32.totalorder %s21, 1
    %p217 = por %p215, %p216
    %p219 = scmp.ne.s32.totalorder %s204, %s218
    %p220 = scmp.eq.s32.totalorder %s21, 0
    %p221 = por %p219, %p220
    %s222 = ssub.s32 %s15, %s22
    %p223 = scmp.eq.s32.totalorder %s222, 0
    %s225 = sadd.s32 %s224, 1
    %s226 = scalar_select %p223, %s224, %s225
    %p229 = pneg %p223
    %p230 = scmp.eq.s32.totalorder %s15, 1
    %p231 = por %p229, %p230
    %p232 = scmp.ne.s32.totalorder %s224, %s227
    %p233 = scmp.eq.s32.totalorder %s15, 0
    %p234 = por %p232, %p233
    %p235 = scmp.ne.s32.totalorder %s224, %s227
    %p236 = scmp.eq.s32.totalorder %s20, 1
    %p237 = por %p235, %p236
    %p238 = scmp.ne.s32.totalorder %s227, %s228
    %p239 = scmp.eq.s32.totalorder %s20, 0
    %p240 = por %p238, %p239
    %p241 = scmp.ne.s32.totalorder %s227, %s228
    %p242 = scmp.eq.s32.totalorder %s21, 1
    %p243 = por %p241, %p242
    %p245 = scmp.ne.s32.totalorder %s228, %s244
    %p246 = scmp.eq.s32.totalorder %s21, 0
    %p247 = por %p245, %p246
    %p248 = scmp.le.s32.totalorder 1, %s15
    %p249 = scmp.lt.s32.totalorder %s15, 3
    %p250 = pnand %p248, %p249
    %p251 = pneg %p250
    // Predicated region
    $region9: #{bottleneck_forward.5} parent=5 // pred_check
      _
    $region10: #{bottleneck_forward.5} parent=5 // pred_check_branch
      %253 = sbr.rel (%p250) target = $region12
    $region11: #{bottleneck_forward.5} parent=5 // pred_region
      %s254 = ssub.s32 %s15, 1
      // Predicated region
      $region13: #{bottleneck_forward.5} parent=11 // pred_check
        %p255 = pneg %p88
      $region14: #{bottleneck_forward.5} parent=11 // pred_check_branch
        %257 = sbr.rel (%p255) target = $region16
      $region15: #{bottleneck_forward.5} parent=11 // pred_region
        _
      $region16: #{bottleneck_forward.5} parent=11 // pred_fallthru
        _
      // Predicated region
      $region17: #{bottleneck_forward.5} parent=11 // pred_check
        %p258 = pneg %p109
      $region18: #{bottleneck_forward.5} parent=11 // pred_check_branch
        %260 = sbr.rel (%p258) target = $region20
      $region19: #{bottleneck_forward.5} parent=11 // pred_region
        _
      $region20: #{bottleneck_forward.5} parent=11 // pred_fallthru
        _
      // Predicated region
      $region21: #{bottleneck_forward.5} parent=11 // pred_check
        %p261 = pneg %p130
      $region22: #{bottleneck_forward.5} parent=11 // pred_check_branch
        %263 = sbr.rel (%p261) target = $region24
      $region23: #{bottleneck_forward.5} parent=11 // pred_region
        _
      $region24: #{bottleneck_forward.5} parent=11 // pred_fallthru
        _
      // Predicated region
      $region25: #{bottleneck_forward.5} parent=11 // pred_check
        %p264 = pneg %p151
      $region26: #{bottleneck_forward.5} parent=11 // pred_check_branch
        %266 = sbr.rel (%p264) target = $region28
      $region27: #{bottleneck_forward.5} parent=11 // pred_region
        _
      $region28: #{bottleneck_forward.5} parent=11 // pred_fallthru
        _
      // Predicated region
      $region29: #{bottleneck_forward.5} parent=11 // pred_check
        %p267 = pneg %p172
      $region30: #{bottleneck_forward.5} parent=11 // pred_check_branch
        %269 = sbr.rel (%p267) target = $region32
      $region31: #{bottleneck_forward.5} parent=11 // pred_region
        _
      $region32: #{bottleneck_forward.5} parent=11 // pred_fallthru
        _
      // Predicated region
      $region33: #{bottleneck_forward.5} parent=11 // pred_check
        %p270 = pneg %p193
      $region34: #{bottleneck_forward.5} parent=11 // pred_check_branch
        %272 = sbr.rel (%p270) target = $region36
      $region35: #{bottleneck_forward.5} parent=11 // pred_region
        _
      $region36: #{bottleneck_forward.5} parent=11 // pred_fallthru
        _
      // Predicated region
      $region37: #{bottleneck_forward.5} parent=11 // pred_check
        %p273 = pneg %p214
      $region38: #{bottleneck_forward.5} parent=11 // pred_check_branch
        %275 = sbr.rel (%p273) target = $region40
      $region39: #{bottleneck_forward.5} parent=11 // pred_region
        _
      $region40: #{bottleneck_forward.5} parent=11 // pred_fallthru
        _
    $region12: #{bottleneck_forward.5} parent=5 // pred_fallthru
      _
    %p276 = scmp.lt.s32.totalorder %s15, 2
    // Predicated region
    $region41: #{bottleneck_forward.5} parent=5 // pred_check
      %p277 = pneg %p276
    $region42: #{bottleneck_forward.5} parent=5 // pred_check_branch
      %279 = sbr.rel (%p277) target = $region44
    $region43: #{bottleneck_forward.5} parent=5 // pred_region
      // Predicated region
      $region45: #{bottleneck_forward.5} parent=43 // pred_check
        %p280 = pneg %p35
      $region46: #{bottleneck_forward.5} parent=43 // pred_check_branch
        %282 = sbr.rel (%p280) target = $region48
      $region47: #{bottleneck_forward.5} parent=43 // pred_region
        %p283 = scmp.lt.s32.totalorder %s15, 1
        %s284 = scalar_select %p283, %s15, 1
        %s285 = smul.addr %s284, 2
        %s286 = smul.addr %s285, 8
        %s287 = scalar_lea.vmem %s0, %s286
      $region48: #{bottleneck_forward.5} parent=43 // pred_fallthru
        _
      // Predicated region
      $region49: #{bottleneck_forward.5} parent=43 // pred_check
        %p288 = pneg %p61
      $region50: #{bottleneck_forward.5} parent=43 // pred_check_branch
        %290 = sbr.rel (%p288) target = $region52
      $region51: #{bottleneck_forward.5} parent=43 // pred_region
        %p291 = scmp.lt.s32.totalorder %s15, 1
        %s292 = scalar_select %p291, %s15, 1
        %s293 = smul.addr %s292, 2
        %s294 = smul.addr %s293, 4
        %s295 = scalar_lea.vmem %s1, %s294
      $region52: #{bottleneck_forward.5} parent=43 // pred_fallthru
        _
    $region44: #{bottleneck_forward.5} parent=5 // pred_fallthru
      _
    %p296 = scmp.le.s32.totalorder 1, %s15
    %p297 = scmp.lt.s32.totalorder %s15, 3
    %p298 = pnand %p296, %p297
    %p299 = pneg %p298
    // Predicated region
    $region53: #{bottleneck_forward.5} parent=5 // pred_check
      _
    $region54: #{bottleneck_forward.5} parent=5 // pred_check_branch
      %301 = sbr.rel (%p298) target = $region56
    $region55: #{bottleneck_forward.5} parent=5 // pred_region
      %s302 = ssub.s32 %s15, 1
      %p303 = scmp.lt.s32.totalorder %s20, 1
      %s304 = scalar_select %p303, %s20, 1
      %s305 = smul.addr %s304, 2
      %s306 = smul.addr %s305, 8
      %s307 = scalar_lea.vmem %s0, %s306
      %p308 = pneg %p41
      %p309 = pneg %p38
      %p310 = scmp.lt.s32.totalorder %s20, 1
      %s311 = scalar_select %p310, %s20, 1
      %s312 = smul.addr %s311, 2
      %s313 = smul.addr %s312, 4
      %s314 = scalar_lea.vmem %s1, %s313
      %p315 = pneg %p67
      %p316 = pneg %p64
      %p317 = pneg %p88
      %p318 = pneg %p85
      %p319 = pneg %p109
      %p320 = pneg %p106
      %p321 = pneg %p130
      %p322 = pneg %p127
      %p323 = pneg %p151
      %p324 = pneg %p148
      %p325 = pneg %p172
      %p326 = pneg %p169
      %p327 = pneg %p193
      %p328 = pneg %p190
      %p329 = pneg %p214
      %p330 = pneg %p211
      %p331 = pneg %p240
      %p332 = pneg %p237
      %p333 = scmp.lt.s32.totalorder %s20, 1
      %s334 = scalar_select %p333, %s20, 1
      %s335 = smul.addr %s334, 2
      %s336 = smul.addr %s335, 8
      %s337 = scalar_lea.vmem %s9, %s336
      %p338 = scmp.lt.s32.totalorder %s20, 1
      %s339 = scalar_select %p338, %s20, 1
      %s340 = smul.addr %s339, 2
      %s341 = smul.addr %s340, 8
      %s342 = scalar_lea.vmem %s0, %s341
      %p343 = scmp.lt.s32.totalorder %s20, 1
      %s344 = scalar_select %p343, %s20, 1
      %s345 = smul.addr %s344, 2
      %s346 = smul.addr %s345, 4
      %s347 = scalar_lea.vmem %s1, %s346
      %p348 = scmp.lt.s32.totalorder %s20, 1
      %s349 = scalar_select %p348, %s20, 1
      %s350 = smul.addr %s349, 2
      %s351 = smul.addr %s350, 8
      %s352 = scalar_lea.vmem %s9, %s351
      %v353 = vld [vmem:[%s5] sm:$0xff]
      %v354 = vld [vmem:[%s5 + $0x8] sm:$0xff]
      %v355 = vld [vmem:[%s5 + $0x10] sm:$0xff]
      %v356 = vld [vmem:[%s5 + $0x18] sm:$0xff]
      %v357 = vld [vmem:[%s5 + $0x20] sm:$0xff]
      %v358 = vld [vmem:[%s5 + $0x28] sm:$0xff]
      %v359 = vld [vmem:[%s5 + $0x30] sm:$0xff]
      %v360 = vld [vmem:[%s5 + $0x38] sm:$0xff]
      %v361 = vld [vmem:[%s5 + $0x40] sm:$0xff]
      %v362 = vld [vmem:[%s5 + $0x48] sm:$0xff]
      %v363 = vld [vmem:[%s5 + $0x50] sm:$0xff]
      %v364 = vld [vmem:[%s5 + $0x58] sm:$0xff]
      %v365 = vld [vmem:[%s5 + $0x60] sm:$0xff]
      %v366 = vld [vmem:[%s5 + $0x68] sm:$0xff]
      %v367 = vld [vmem:[%s5 + $0x70] sm:$0xff]
      %v368 = vld [vmem:[%s5 + $0x78] sm:$0xff]
      %v369 = vld [vmem:[%s5 + $0x80] sm:$0xff]
      %v370 = vld [vmem:[%s5 + $0x88] sm:$0xff]
      %v371 = vld [vmem:[%s5 + $0x90] sm:$0xff]
      %v372 = vld [vmem:[%s5 + $0x98] sm:$0xff]
      %v373 = vld [vmem:[%s5 + $0xa0] sm:$0xff]
      %v374 = vld [vmem:[%s5 + $0xa8] sm:$0xff]
      %v375 = vld [vmem:[%s5 + $0xb0] sm:$0xff]
      %v376 = vld [vmem:[%s5 + $0xb8] sm:$0xff]
      %v377 = vld [vmem:[%s5 + $0xc0] sm:$0xff]
      %v378 = vld [vmem:[%s5 + $0xc8] sm:$0xff]
      %v379 = vld [vmem:[%s5 + $0xd0] sm:$0xff]
      %v380 = vld [vmem:[%s5 + $0xd8] sm:$0xff]
      %v381 = vld [vmem:[%s5 + $0xe0] sm:$0xff]
      %v382 = vld [vmem:[%s5 + $0xe8] sm:$0xff]
      %v383 = vld [vmem:[%s5 + $0xf0] sm:$0xff]
      %v384 = vld [vmem:[%s5 + $0xf8] sm:$0xff]
      %v385 = vld [vmem:[%s342] sm:$0xff]
      %v386 = vld [vmem:[%s342 + $0x8] sm:$0xff]
      %387 = vmatprep.subr.mxu0 0.0
      %388 = vmatpush1.msra.mxu0 %v353
      %389 = vmatprep.subr.mxu0 0.0
      %390 = vmatpush1.msra.mxu0 %v354
      %391 = vmatprep.subr.mxu0 0.0
      %392 = vmatpush1.msra.mxu0 %v355
      %393 = vmatprep.subr.mxu0 0.0
      %394 = vmatpush1.msra.mxu0 %v356
      %395 = vmatprep.subr.mxu0 0.0
      %396 = vmatpush1.msra.mxu0 %v357
      %397 = vmatprep.subr.mxu0 0.0
      %398 = vmatpush1.msra.mxu0 %v358
      %399 = vmatprep.subr.mxu0 0.0
      %400 = vmatpush1.msra.mxu0 %v359
      %401 = vmatprep.subr.mxu0 0.0
      %402 = vmatpush1.msra.mxu0 %v360
      %403 = vmatprep.subr.mxu0 0.0
      %404 = vmatpush1.msra.mxu0 %v361
      %405 = vmatprep.subr.mxu0 0.0
      %406 = vmatpush1.msra.mxu0 %v362
      %407 = vmatprep.subr.mxu0 0.0
      %408 = vmatpush1.msra.mxu0 %v363
      %409 = vmatprep.subr.mxu0 0.0
      %410 = vmatpush1.msra.mxu0 %v364
      %411 = vmatprep.subr.mxu0 0.0
      %412 = vmatpush1.msra.mxu0 %v365
      %413 = vmatprep.subr.mxu0 0.0
      %414 = vmatpush1.msra.mxu0 %v366
      %415 = vmatprep.subr.mxu0 0.0
      %416 = vmatpush1.msra.mxu0 %v367
      %417 = vmatprep.subr.mxu0 0.0
      %418 = vmatpush1.msra.mxu0 %v368
      %419 = vmatprep.subr.mxu0 0.0
      %420 = vmatpush1.msra.mxu0 %v369
      %421 = vmatprep.subr.mxu0 0.0
      %422 = vmatpush1.msra.mxu0 %v370
      %423 = vmatprep.subr.mxu0 0.0
      %424 = vmatpush1.msra.mxu0 %v371
      %425 = vmatprep.subr.mxu0 0.0
      %426 = vmatpush1.msra.mxu0 %v372
      %427 = vmatprep.subr.mxu0 0.0
      %428 = vmatpush1.msra.mxu0 %v373
      %429 = vmatprep.subr.mxu0 0.0
      %430 = vmatpush1.msra.mxu0 %v374
      %431 = vmatprep.subr.mxu0 0.0
      %432 = vmatpush1.msra.mxu0 %v375
      %433 = vmatprep.subr.mxu0 0.0
      %434 = vmatpush1.msra.mxu0 %v376
      %435 = vmatprep.subr.mxu0 0.0
      %436 = vmatpush1.msra.mxu0 %v377
      %437 = vmatprep.subr.mxu0 0.0
      %438 = vmatpush1.msra.mxu0 %v378
      %439 = vmatprep.subr.mxu0 0.0
      %440 = vmatpush1.msra.mxu0 %v379
      %441 = vmatprep.subr.mxu0 0.0
      %442 = vmatpush1.msra.mxu0 %v380
      %443 = vmatprep.subr.mxu0 0.0
      %444 = vmatpush1.msra.mxu0 %v381
      %445 = vmatprep.subr.mxu0 0.0
      %446 = vmatpush1.msra.mxu0 %v382
      %447 = vmatprep.subr.mxu0 0.0
      %448 = vmatpush1.msra.mxu0 %v383
      %449 = vmatprep.subr.mxu0 0.0
      %450 = vmatpush1.msra.mxu0 %v384
      %451 = vmatprep.mubr.f32.mxu0 %v386
      %452 = vmatmul.mubr.f32.gmra.mrb[0].mxu0 %v385
      %v453 = vpop.f32.mrb[0].mxu0
      %v454 = vadd.f32 0.0, %v453
      %v455 = vpop.f32.mrb[0].mxu0
      %456 = vdwg.mxu0
      %v457 = vld [vmem:[%s2] sm:$0xff]
      %v458 = vld [vmem:[%s2 + $0x8] sm:$0xff]
      %vm459 = vcmask 64512
      %v461 = vsel %vm459, %v457, 0
      %v464 = vsel %vm459, %v458, 0
      %466 = vmatprep.subr.mxu0 0.0
      %467 = vmatpush1.msra.mxu0 %v454
      %468 = vmatprep.subr.mxu0 0.0
      %469 = vmatpush1.msra.mxu0 0.0
      %470 = vmatprep.subr.mxu0 0.0
      %471 = vmatpush1.msra.mxu0 0.0
      %472 = vmatprep.subr.mxu0 0.0
      %473 = vmatpush1.msra.mxu0 0.0
      %474 = vmatprep.subr.mxu0 0.0
      %475 = vmatpush1.msra.mxu0 0.0
      %476 = vmatprep.subr.mxu0 0.0
      %477 = vmatpush1.msra.mxu0 0.0
      %478 = vmatprep.subr.mxu0 0.0
      %479 = vmatpush1.msra.mxu0 0.0
      %480 = vmatprep.subr.mxu0 0.0
      %481 = vmatpush1.msra.mxu0 0.0
      %482 = vmatprep.subr.mxu0 0.0
      %483 = vmatpush1.msra.mxu0 0.0
      %484 = vmatprep.subr.mxu0 0.0
      %485 = vmatpush1.msra.mxu0 0.0
      %486 = vmatprep.subr.mxu0 0.0
      %487 = vmatpush1.msra.mxu0 0.0
      %488 = vmatprep.subr.mxu0 0.0
      %489 = vmatpush1.msra.mxu0 0.0
      %490 = vmatprep.subr.mxu0 0.0
      %491 = vmatpush1.msra.mxu0 0.0
      %492 = vmatprep.subr.mxu0 0.0
      %493 = vmatpush1.msra.mxu0 0.0
      %494 = vmatprep.subr.mxu0 0.0
      %495 = vmatpush1.msra.mxu0 0.0
      %496 = vmatprep.subr.mxu0 0.0
      %497 = vmatpush1.msra.mxu0 0.0
      %498 = vmatprep.subr.mxu0 0.0
      %499 = vmatpush1.msra.mxu0 0.0
      %500 = vmatprep.subr.mxu0 0.0
      %501 = vmatpush1.msra.mxu0 0.0
      %502 = vmatprep.subr.mxu0 0.0
      %503 = vmatpush1.msra.mxu0 0.0
      %504 = vmatprep.subr.mxu0 0.0
      %505 = vmatpush1.msra.mxu0 0.0
      %506 = vmatprep.subr.mxu0 0.0
      %507 = vmatpush1.msra.mxu0 0.0
      %508 = vmatprep.subr.mxu0 0.0
      %509 = vmatpush1.msra.mxu0 0.0
      %510 = vmatprep.subr.mxu0 0.0
      %511 = vmatpush1.msra.mxu0 0.0
      %512 = vmatprep.subr.mxu0 0.0
      %513 = vmatpush1.msra.mxu0 0.0
      %514 = vmatprep.subr.mxu0 0.0
      %515 = vmatpush1.msra.mxu0 0.0
      %516 = vmatprep.subr.mxu0 0.0
      %517 = vmatpush1.msra.mxu0 0.0
      %518 = vmatprep.subr.mxu0 0.0
      %519 = vmatpush1.msra.mxu0 0.0
      %520 = vmatprep.subr.mxu0 0.0
      %521 = vmatpush1.msra.mxu0 0.0
      %522 = vmatprep.subr.mxu0 0.0
      %523 = vmatpush1.msra.mxu0 0.0
      %524 = vmatprep.subr.mxu0 0.0
      %525 = vmatpush1.msra.mxu0 0.0
      %526 = vmatprep.subr.mxu0 0.0
      %527 = vmatpush1.msra.mxu0 0.0
      %528 = vmatprep.subr.mxu0 0.0
      %529 = vmatpush1.msra.mxu0 0.0
      %530 = vmatprep.mubr.f32.mxu0 0.0
      %531 = vmatmul.mubr.f32.gmra.mrb[0].mxu0 %v461
      %v532 = vpop.f32.mrb[0].mxu0
      %v533 = vadd.f32 0.0, %v532
      %v534 = vpop.f32.mrb[0].mxu0
      %535 = vmatprep.mubr.f32.mxu0 0.0
      %536 = vmatmul.mubr.f32.gmra.mrb[0].mxu0 %v464
      %v537 = vpop.f32.mrb[0].mxu0
      %v538 = vadd.f32 0.0, %v537
      %v539 = vpop.f32.mrb[0].mxu0
      %540 = vdwg.mxu0
      %v541 = vld [vmem:[%s3] sm:$0xff]
      %v542 = vld [vmem:[%s3 + $0x8] sm:$0xff]
      %544 = vset.pattern.permute.xlu0 0
      %545 = vperm.xlu0 %544, %v541
      %v546 = vpop.permute.xlu0 %545
      %549 = vset.pattern.permute.xlu0 0
      %550 = vperm.xlu0 %549, %v542
      %v551 = vpop.permute.xlu0 %550
      %v553 = vmul.f32 %v533, %v546
      %v554 = vmul.f32 %v538, %v551
      %v555 = vld [vmem:[%s4] sm:$0xff]
      %v556 = vld [vmem:[%s4 + $0x8] sm:$0xff]
      %558 = vset.pattern.permute.xlu0 0
      %559 = vperm.xlu0 %558, %v555
      %v560 = vpop.permute.xlu0 %559
      %563 = vset.pattern.permute.xlu0 0
      %564 = vperm.xlu0 %563, %v556
      %v565 = vpop.permute.xlu0 %564
      %v567 = vadd.f32 %v553, %v560
      %v568 = vadd.f32 %v554, %v565
      %v569 = vld [vmem:[%s347] sm:$0xff]
      %v571 = vcombine.high %v569, %v569
      %573 = vmatprep.subr.mxu0 0.0
      %574 = vmatpush1.msra.mxu0 %v353
      %575 = vmatprep.subr.mxu0 0.0
      %576 = vmatpush1.msra.mxu0 %v354
      %577 = vmatprep.subr.mxu0 0.0
      %578 = vmatpush1.msra.mxu0 %v355
      %579 = vmatprep.subr.mxu0 0.0
      %580 = vmatpush1.msra.mxu0 %v356
      %581 = vmatprep.subr.mxu0 0.0
      %582 = vmatpush1.msra.mxu0 %v357
      %583 = vmatprep.subr.mxu0 0.0
      %584 = vmatpush1.msra.mxu0 %v358
      %585 = vmatprep.subr.mxu0 0.0
      %586 = vmatpush1.msra.mxu0 %v359
      %587 = vmatprep.subr.mxu0 0.0
      %588 = vmatpush1.msra.mxu0 %v360
      %589 = vmatprep.subr.mxu0 0.0
      %590 = vmatpush1.msra.mxu0 %v361
      %591 = vmatprep.subr.mxu0 0.0
      %592 = vmatpush1.msra.mxu0 %v362
      %593 = vmatprep.subr.mxu0 0.0
      %594 = vmatpush1.msra.mxu0 %v363
      %595 = vmatprep.subr.mxu0 0.0
      %596 = vmatpush1.msra.mxu0 %v364
      %597 = vmatprep.subr.mxu0 0.0
      %598 = vmatpush1.msra.mxu0 %v365
      %599 = vmatprep.subr.mxu0 0.0
      %600 = vmatpush1.msra.mxu0 %v366
      %601 = vmatprep.subr.mxu0 0.0
      %602 = vmatpush1.msra.mxu0 %v367
      %603 = vmatprep.subr.mxu0 0.0
      %604 = vmatpush1.msra.mxu0 %v368
      %605 = vmatprep.subr.mxu0 0.0
      %606 = vmatpush1.msra.mxu0 %v369
      %607 = vmatprep.subr.mxu0 0.0
      %608 = vmatpush1.msra.mxu0 %v370
      %609 = vmatprep.subr.mxu0 0.0
      %610 = vmatpush1.msra.mxu0 %v371
      %611 = vmatprep.subr.mxu0 0.0
      %612 = vmatpush1.msra.mxu0 %v372
      %613 = vmatprep.subr.mxu0 0.0
      %614 = vmatpush1.msra.mxu0 %v373
      %615 = vmatprep.subr.mxu0 0.0
      %616 = vmatpush1.msra.mxu0 %v374
      %617 = vmatprep.subr.mxu0 0.0
      %618 = vmatpush1.msra.mxu0 %v375
      %619 = vmatprep.subr.mxu0 0.0
      %620 = vmatpush1.msra.mxu0 %v376
      %621 = vmatprep.subr.mxu0 0.0
      %622 = vmatpush1.msra.mxu0 %v377
      %623 = vmatprep.subr.mxu0 0.0
      %624 = vmatpush1.msra.mxu0 %v378
      %625 = vmatprep.subr.mxu0 0.0
      %626 = vmatpush1.msra.mxu0 %v379
      %627 = vmatprep.subr.mxu0 0.0
      %628 = vmatpush1.msra.mxu0 %v380
      %629 = vmatprep.subr.mxu0 0.0
      %630 = vmatpush1.msra.mxu0 %v381
      %631 = vmatprep.subr.mxu0 0.0
      %632 = vmatpush1.msra.mxu0 %v382
      %633 = vmatprep.subr.mxu0 0.0
      %634 = vmatpush1.msra.mxu0 %v383
      %635 = vmatprep.subr.mxu0 0.0
      %636 = vmatpush1.msra.mxu0 %v384
      %637 = vmatprep.mubr.f32.mxu0 %v571
      %638 = vmatmul.mubr.f32.gmra.mrb[0].mxu0 %v569
      %v639 = vpop.f32.mrb[0].mxu0
      %v640 = vadd.f32 0.0, %v639
      %v641 = vpop.f32.mrb[0].mxu0
      %642 = vdwg.mxu0
      %v643 = vld [vmem:[%s6] sm:$0xff]
      %v644 = vld [vmem:[%s6 + $0x8] sm:$0xff]
      %vm645 = vcmask 31744
      %v647 = vsel %vm645, %v643, 0
      %v650 = vsel %vm645, %v644, 0
      %vm652 = vcmask 1043456
      %v654 = vsel %vm652, %v640, 0
      %656 = vmatprep.subr.mxu0 0.0
      %657 = vmatpush1.msra.mxu0 %v654
      %658 = vmatprep.subr.mxu0 0.0
      %659 = vmatpush1.msra.mxu0 0.0
      %660 = vmatprep.subr.mxu0 0.0
      %661 = vmatpush1.msra.mxu0 0.0
      %662 = vmatprep.subr.mxu0 0.0
      %663 = vmatpush1.msra.mxu0 0.0
      %664 = vmatprep.subr.mxu0 0.0
      %665 = vmatpush1.msra.mxu0 0.0
      %666 = vmatprep.subr.mxu0 0.0
      %667 = vmatpush1.msra.mxu0 0.0
      %668 = vmatprep.subr.mxu0 0.0
      %669 = vmatpush1.msra.mxu0 0.0
      %670 = vmatprep.subr.mxu0 0.0
      %671 = vmatpush1.msra.mxu0 0.0
      %672 = vmatprep.subr.mxu0 0.0
      %673 = vmatpush1.msra.mxu0 0.0
      %674 = vmatprep.subr.mxu0 0.0
      %675 = vmatpush1.msra.mxu0 0.0
      %676 = vmatprep.subr.mxu0 0.0
      %677 = vmatpush1.msra.mxu0 0.0
      %678 = vmatprep.subr.mxu0 0.0
      %679 = vmatpush1.msra.mxu0 0.0
      %680 = vmatprep.subr.mxu0 0.0
      %681 = vmatpush1.msra.mxu0 0.0
      %682 = vmatprep.subr.mxu0 0.0
      %683 = vmatpush1.msra.mxu0 0.0
      %684 = vmatprep.subr.mxu0 0.0
      %685 = vmatpush1.msra.mxu0 0.0
      %686 = vmatprep.subr.mxu0 0.0
      %687 = vmatpush1.msra.mxu0 0.0
      %688 = vmatprep.subr.mxu0 0.0
      %689 = vmatpush1.msra.mxu0 0.0
      %690 = vmatprep.subr.mxu0 0.0
      %691 = vmatpush1.msra.mxu0 0.0
      %692 = vmatprep.subr.mxu0 0.0
      %693 = vmatpush1.msra.mxu0 0.0
      %694 = vmatprep.subr.mxu0 0.0
      %695 = vmatpush1.msra.mxu0 0.0
      %696 = vmatprep.subr.mxu0 0.0
      %697 = vmatpush1.msra.mxu0 0.0
      %698 = vmatprep.subr.mxu0 0.0
      %699 = vmatpush1.msra.mxu0 0.0
      %700 = vmatprep.subr.mxu0 0.0
      %701 = vmatpush1.msra.mxu0 0.0
      %702 = vmatprep.subr.mxu0 0.0
      %703 = vmatpush1.msra.mxu0 0.0
      %704 = vmatprep.subr.mxu0 0.0
      %705 = vmatpush1.msra.mxu0 0.0
      %706 = vmatprep.subr.mxu0 0.0
      %707 = vmatpush1.msra.mxu0 0.0
      %708 = vmatprep.subr.mxu0 0.0
      %709 = vmatpush1.msra.mxu0 0.0
      %710 = vmatprep.subr.mxu0 0.0
      %711 = vmatpush1.msra.mxu0 0.0
      %712 = vmatprep.subr.mxu0 0.0
      %713 = vmatpush1.msra.mxu0 0.0
      %714 = vmatprep.subr.mxu0 0.0
      %715 = vmatpush1.msra.mxu0 0.0
      %716 = vmatprep.subr.mxu0 0.0
      %717 = vmatpush1.msra.mxu0 0.0
      %718 = vmatprep.subr.mxu0 0.0
      %719 = vmatpush1.msra.mxu0 0.0
      %720 = vmatprep.mubr.f32.mxu0 0.0
      %721 = vmatmul.mubr.f32.gmra.mrb[0].mxu0 %v647
      %v722 = vpop.f32.mrb[0].mxu0
      %v723 = vadd.f32 0.0, %v722
      %v724 = vpop.f32.mrb[0].mxu0
      %725 = vmatprep.mubr.f32.mxu0 0.0
      %726 = vmatmul.mubr.f32.gmra.mrb[0].mxu0 %v650
      %v727 = vpop.f32.mrb[0].mxu0
      %v728 = vadd.f32 0.0, %v727
      %v729 = vpop.f32.mrb[0].mxu0
      %730 = vdwg.mxu0
      %v731 = vld [vmem:[%s7] sm:$0xff]
      %v732 = vld [vmem:[%s7 + $0x8] sm:$0xff]
      %734 = vset.pattern.permute.xlu0 0
      %735 = vperm.xlu0 %734, %v731
      %v736 = vpop.permute.xlu0 %735
      %739 = vset.pattern.permute.xlu0 0
      %740 = vperm.xlu0 %739, %v732
      %v741 = vpop.permute.xlu0 %740
      %v743 = vmul.f32 %v723, %v736
      %v744 = vmul.f32 %v728, %v741
      %v745 = vld [vmem:[%s8] sm:$0xff]
      %v746 = vld [vmem:[%s8 + $0x8] sm:$0xff]
      %748 = vset.pattern.permute.xlu0 0
      %749 = vperm.xlu0 %748, %v745
      %v750 = vpop.permute.xlu0 %749
      %753 = vset.pattern.permute.xlu0 0
      %754 = vperm.xlu0 %753, %v746
      %v755 = vpop.permute.xlu0 %754
      %v757 = vadd.f32 %v743, %v750
      %v758 = vadd.f32 %v744, %v755
      %v759 = vadd.f32 %v567, %v757
      %v760 = vadd.f32 %v568, %v758
      %v761 = vmax.f32 %v759, 0.0
      %v762 = vmax.f32 %v760, 0.0
      %vm763 = vcmask 523264
      %764 = vst.msk [vmem:[%s352] sm:$0xff] %vm763, %v761
      %765 = vst.msk [vmem:[%s352 + $0x8] sm:$0xff] %vm763, %v762
      %p766 = scmp.lt.s32.totalorder %s20, 1
      %s767 = scalar_select %p766, %s20, 1
      %s768 = smul.addr %s767, 2
      %s769 = smul.addr %s768, 8
      %s770 = scalar_lea.vmem %s9, %s769
      // Predicated region
      $region57: #{bottleneck_forward.5} parent=55 // pred_check
        %p771 = pneg %p237
      $region58: #{bottleneck_forward.5} parent=55 // pred_check_branch
        %773 = sbr.rel (%p771) target = $region60
      $region59: #{bottleneck_forward.5} parent=55 // pred_region
        _
      $region60: #{bottleneck_forward.5} parent=55 // pred_fallthru
        _
    $region56: #{bottleneck_forward.5} parent=5 // pred_fallthru
      _
    %p774 = scmp.le.s32.totalorder 2, %s15
    // Predicated region
    $region61: #{bottleneck_forward.5} parent=5 // pred_check
      %p775 = pneg %p774
    $region62: #{bottleneck_forward.5} parent=5 // pred_check_branch
      %777 = sbr.rel (%p775) target = $region64
    $region63: #{bottleneck_forward.5} parent=5 // pred_region
      %s778 = ssub.s32 %s15, 2
      // Predicated region
      $region65: #{bottleneck_forward.5} parent=63 // pred_check
        %p779 = pneg %p243
      $region66: #{bottleneck_forward.5} parent=63 // pred_check_branch
        %781 = sbr.rel (%p779) target = $region68
      $region67: #{bottleneck_forward.5} parent=63 // pred_region
        %p782 = scmp.lt.s32.totalorder %s21, 1
        %s783 = scalar_select %p782, %s21, 1
        %s784 = smul.addr %s783, 2
        %s785 = smul.addr %s784, 8
        %s786 = scalar_lea.vmem %s9, %s785
      $region68: #{bottleneck_forward.5} parent=63 // pred_fallthru
        _
    $region64: #{bottleneck_forward.5} parent=5 // pred_fallthru
      _
  $region6: #{bottleneck_forward.5} parent=0 // loop_footer
    %s19 = sadd.s32 1, %s15
  $region7: #{bottleneck_forward.5} parent=0 // loop_footer_branch
    %14 = sbr.rel target = $region3
  $region8: #{bottleneck_forward.5} parent=0 // loop_exit
    _

</llo_original>
